<compile_context>
chip_gen: v7x
topology: tpu7x:2x2x1
jax: 0.10.0
libtpu: 0.0.40
codegen_flags: <defaults>
</compile_context>

<pallas_src>
import functools

import jax
import jax.numpy as jnp
from jax.experimental import pallas as pl
from jax.experimental.pallas import tpu as pltpu

EPS = 1e-5


def _resblock_kernel(x_ref, w1_ref, g1_ref, b1_ref,
                     w2_ref, g2_ref, b2_ref, w3_ref,
                     o_ref, stack_ref, *, N, H, W):
    # x_ref    : (N, C, H*W) f32   -- free reshape of NCHW (no wrapper transpose)
    # w*_ref   : (Cout, 9*C) bf16  -- tap-major packed conv weights (k = kh*3 + kw)
    # g*/b*_ref: (Cout, 1) f32     -- BatchNorm affine params
    # o_ref    : (N, C, H*W) f32
    # stack_ref: (9*C, N*H*W) f32 VMEM scratch for the stacked conv operand
    HW = H * W
    C = x_ref.shape[1]
    NP = N * HW

    # Assemble lane-dense (C, N*HW): lane-aligned concat over images (HW is a
    # multiple of 128), done once in VMEM.
    x = jnp.concatenate([x_ref[n] for n in range(N)], axis=1)          # (C, NP) f32

    # Boundary masks: computed once, reused by all three convs.
    p = jax.lax.broadcasted_iota(jnp.int32, (1, NP), 1)
    if (W & (W - 1)) == 0 and (HW & (HW - 1)) == 0:
        col = p & (W - 1)                                              # shift/and path
        row = (p & (HW - 1)) >> (W - 1).bit_length()
    else:
        col = jax.lax.rem(p, W)
        row = jax.lax.rem(p, HW) // W
    ones = jnp.ones((1, NP), jnp.float32)
    col_ok = {-1: (col >= 1).astype(jnp.float32), 0: ones,
              1: (col < W - 1).astype(jnp.float32)}
    row_ok = {-1: (row >= 1).astype(jnp.float32), 0: ones,
              1: (row < H - 1).astype(jnp.float32)}
    tap_mask = [row_ok[kh - 1] * col_ok[kw - 1]
                for kh in range(3) for kw in range(3)]                 # 9 x (1, NP)

    def conv3x3(xin, w_ref):
        # Prologue: build the stacked (9*C, NP) shifted+masked operand in f32
        # (rolls -> XLU, masks -> VPU), then one bf16 downcast and ONE MXU
        # matmul with K = 9*C, f32 accumulation.
        for kh in range(3):
            for kw in range(3):
                k = kh * 3 + kw
                s = (kh - 1) * W + (kw - 1)
                xs = xin if s == 0 else jnp.roll(xin, -s, axis=1)
                if k != 4:                                             # center tap: no mask
                    xs = xs * tap_mask[k]
                stack_ref[k * C:(k + 1) * C, :] = xs
        stacked = stack_ref[...].astype(jnp.bfloat16)                  # (9C, NP) bf16
        return jnp.dot(w_ref[...], stacked,
                       preferred_element_type=jnp.float32)             # (Cout, NP) f32

    def batchnorm(h, g_ref, b_ref):
        # Training-mode BatchNorm2d over all N*H*W lanes; two-pass (centered)
        # biased variance; eps = 1e-5.
        mean = jnp.mean(h, axis=1, keepdims=True)
        c = h - mean
        var = jnp.mean(c * c, axis=1, keepdims=True)
        return c * jax.lax.rsqrt(var + EPS) * g_ref[...] + b_ref[...]

    def glu(h):
        half = h.shape[0] // 2
        return h[:half, :] * jax.nn.sigmoid(h[half:, :])

    h = glu(batchnorm(conv3x3(x, w1_ref), g1_ref, b1_ref))             # (C, NP)
    h = glu(batchnorm(conv3x3(h, w2_ref), g2_ref, b2_ref))             # (C, NP)
    h = conv3x3(h, w3_ref) + x                                         # residual add

    # Per-image lane-dense stores: (C, HW) slabs, HW a multiple of 128.
    for n in range(N):
        o_ref[n] = h[:, n * HW:(n + 1) * HW].astype(o_ref.dtype)


def pack_conv_weight(w):
    """(Cout, Cin, 3, 3) OIHW -> (Cout, 9*Cin) bf16, tap-major (k = kh*3 + kw).
    Done ONCE at parameter-prep time (hoisted out of the forward hot path)."""
    co, ci = w.shape[0], w.shape[1]
    return (jnp.asarray(w, jnp.float32)
            .transpose(0, 2, 3, 1)
            .reshape(co, 9 * ci)
            .astype(jnp.bfloat16))


def pack_bn_param(v):
    """(Cout,) -> (Cout, 1) f32 column vector."""
    return jnp.asarray(v, jnp.float32).reshape(-1, 1)


@jax.jit
def resblock_forward(x_nchw, w1p, g1, b1, w2p, g2, b2, w3p):
    N, C, H, W = x_nchw.shape
    NP = N * H * W
    # Free (bit-level) reshape only -- no bracketing transpose kernels.
    x3d = x_nchw.reshape(N, C, H * W).astype(jnp.float32)

    vmem = pl.BlockSpec(memory_space=pltpu.MemorySpace.VMEM)
    out3d = pl.pallas_call(
        functools.partial(_resblock_kernel, N=N, H=H, W=W),
        out_shape=jax.ShapeDtypeStruct((N, C, H * W), jnp.float32),
        in_specs=[vmem] * 8,
        out_specs=vmem,
        scratch_shapes=[pltpu.VMEM((9 * C, NP), jnp.float32)],
    )(x3d, w1p, g1, b1, w2p, g2, b2, w3p)

    return out3d.reshape(N, C, H, W)


def resblock_ref(x, w1, g1, b1, w2, g2, b2, w3, eps=EPS):
    # Pure-JAX reference with PyTorch ResBlock semantics (training-mode BatchNorm).
    def conv(h, w):
        return jax.lax.conv_general_dilated(
            h, w, window_strides=(1, 1), padding=((1, 1), (1, 1)),
            dimension_numbers=("NCHW", "OIHW", "NCHW"))

    def bn(h, g, b):
        mean = jnp.mean(h, axis=(0, 2, 3), keepdims=True)
        var = jnp.mean((h - mean) ** 2, axis=(0, 2, 3), keepdims=True)
        return ((h - mean) * jax.lax.rsqrt(var + eps)
                * g.reshape(1, -1, 1, 1) + b.reshape(1, -1, 1, 1))

    def glu(h):
        c = h.shape[1] // 2
        return h[:, :c] * jax.nn.sigmoid(h[:, c:])

    h = glu(bn(conv(x, w1), g1, b1))
    h = glu(bn(conv(h, w2), g2, b2))
    h = conv(h, w3)
    return h + x


if __name__ == "__main__":
    key = jax.random.PRNGKey(0)
    kx, k1, k2, k3 = jax.random.split(key, 4)

    N, C, H, W = 2, 4, 16, 16     # channel_num = 4
    x = jax.random.normal(kx, (N, C, H, W), dtype=jnp.float32)

    # Deterministic synthetic conv weights; BatchNorm affine params at PyTorch
    # defaults (gamma=1, beta=0).
    w1 = 0.1 * jax.random.normal(k1, (2 * C, C, 3, 3), dtype=jnp.float32)
    w2 = 0.1 * jax.random.normal(k2, (2 * C, C, 3, 3), dtype=jnp.float32)
    w3 = 0.1 * jax.random.normal(k3, (C, C, 3, 3), dtype=jnp.float32)
    g1 = jnp.ones((2 * C,), jnp.float32)
    b1 = jnp.zeros((2 * C,), jnp.float32)
    g2 = jnp.ones((2 * C,), jnp.float32)
    b2 = jnp.zeros((2 * C,), jnp.float32)

    # Parameter prep done once, outside the per-forward hot path.
    w1p, w2p, w3p = pack_conv_weight(w1), pack_conv_weight(w2), pack_conv_weight(w3)
    g1c, b1c = pack_bn_param(g1), pack_bn_param(b1)
    g2c, b2c = pack_bn_param(g2), pack_bn_param(b2)

    out = resblock_forward(x, w1p, g1c, b1c, w2p, g2c, b2c, w3p)
    out = jax.block_until_ready(out)

    assert out.shape == (N, C, H, W), out.shape
    assert bool(jnp.all(jnp.isfinite(out)))

    ref = resblock_ref(x, w1, g1, b1, w2, g2, b2, w3)
    max_err = float(jnp.max(jnp.abs(out - ref)))
    # bf16 matmul operands with f32 accumulation / f32 norm math vs f32 reference
    # (tolerance tightened from 1e-1 per review).
    assert max_err < 5e-2, f"max abs error vs reference: {max_err}"

    print("KERNEL_OK")
</pallas_src>

<mosaic_0001>
module attributes {stable_mosaic.version = 11 : i64} {
  func.func @_resblock_kernel(%arg0: memref<2x4x256xf32, #tpu.memory_space<vmem>>, %arg1: memref<8x36xbf16, #tpu.memory_space<vmem>>, %arg2: memref<8x1xf32, #tpu.memory_space<vmem>>, %arg3: memref<8x1xf32, #tpu.memory_space<vmem>>, %arg4: memref<8x36xbf16, #tpu.memory_space<vmem>>, %arg5: memref<8x1xf32, #tpu.memory_space<vmem>>, %arg6: memref<8x1xf32, #tpu.memory_space<vmem>>, %arg7: memref<4x36xbf16, #tpu.memory_space<vmem>>, %arg8: memref<2x4x256xf32, #tpu.memory_space<vmem>>, %arg9: memref<36x512xf32, #tpu.memory_space<vmem>>) attributes {dimension_semantics = [], scalar_prefetch = 0 : i64, scratch_operands = 1 : i64, tpu.core_type = #tpu.core_type<tc>} {
    %c0 = arith.constant 0 : index
    %c0_0 = arith.constant 0 : index
    %c0_1 = arith.constant 0 : index
    %0 = vector.load %arg0[%c0, %c0_0, %c0_1] : memref<2x4x256xf32, #tpu.memory_space<vmem>>, vector<1x4x256xf32>
    %1 = vector.shape_cast %0 : vector<1x4x256xf32> to vector<4x256xf32>
    %c1 = arith.constant 1 : index
    %c0_2 = arith.constant 0 : index
    %c0_3 = arith.constant 0 : index
    %2 = vector.load %arg0[%c1, %c0_2, %c0_3] : memref<2x4x256xf32, #tpu.memory_space<vmem>>, vector<1x4x256xf32>
    %3 = vector.shape_cast %2 : vector<1x4x256xf32> to vector<4x256xf32>
    %4 = tpu.concatenate %1, %3 in 1 : vector<4x256xf32>, vector<4x256xf32> -> vector<4x512xf32>
    %5 = tpu.iota {dimensions = array<i32: 1>} : vector<1x512xi32>
    %c15_i32 = arith.constant 15 : i32
    %6 = vector.broadcast %c15_i32 : i32 to vector<1x512xi32>
    %7 = arith.andi %5, %6 : vector<1x512xi32>
    %c255_i32 = arith.constant 255 : i32
    %8 = vector.broadcast %c255_i32 : i32 to vector<1x512xi32>
    %9 = arith.andi %5, %8 : vector<1x512xi32>
    %c4_i32 = arith.constant 4 : i32
    %10 = vector.broadcast %c4_i32 : i32 to vector<1x512xi32>
    %11 = arith.shrsi %9, %10 : vector<1x512xi32>
    %cst = arith.constant 1.000000e+00 : f32
    %12 = vector.broadcast %cst : f32 to vector<1x512xf32>
    %c1_i32 = arith.constant 1 : i32
    %13 = vector.broadcast %c1_i32 : i32 to vector<1x512xi32>
    %14 = arith.cmpi sge, %7, %13 : vector<1x512xi32>
    %15 = arith.extui %14 : vector<1x512xi1> to vector<1x512xi32>
    %16 = arith.sitofp %15 : vector<1x512xi32> to vector<1x512xf32>
    %c15_i32_4 = arith.constant 15 : i32
    %17 = vector.broadcast %c15_i32_4 : i32 to vector<1x512xi32>
    %18 = arith.cmpi slt, %7, %17 : vector<1x512xi32>
    %19 = arith.extui %18 : vector<1x512xi1> to vector<1x512xi32>
    %20 = arith.sitofp %19 : vector<1x512xi32> to vector<1x512xf32>
    %c1_i32_5 = arith.constant 1 : i32
    %21 = vector.broadcast %c1_i32_5 : i32 to vector<1x512xi32>
    %22 = arith.cmpi sge, %11, %21 : vector<1x512xi32>
    %23 = arith.extui %22 : vector<1x512xi1> to vector<1x512xi32>
    %24 = arith.sitofp %23 : vector<1x512xi32> to vector<1x512xf32>
    %c15_i32_6 = arith.constant 15 : i32
    %25 = vector.broadcast %c15_i32_6 : i32 to vector<1x512xi32>
    %26 = arith.cmpi slt, %11, %25 : vector<1x512xi32>
    %27 = arith.extui %26 : vector<1x512xi1> to vector<1x512xi32>
    %28 = arith.sitofp %27 : vector<1x512xi32> to vector<1x512xf32>
    %29 = arith.mulf %24, %16 : vector<1x512xf32>
    %30 = arith.mulf %24, %12 : vector<1x512xf32>
    %31 = arith.mulf %24, %20 : vector<1x512xf32>
    %32 = arith.mulf %12, %16 : vector<1x512xf32>
    %33 = arith.mulf %12, %20 : vector<1x512xf32>
    %34 = arith.mulf %28, %16 : vector<1x512xf32>
    %35 = arith.mulf %28, %12 : vector<1x512xf32>
    %36 = arith.mulf %28, %20 : vector<1x512xf32>
    %37 = vector.extract_strided_slice %4 {offsets = [0, 495], sizes = [4, 17], strides = [1, 1]} : vector<4x512xf32> to vector<4x17xf32>
    %38 = vector.extract_strided_slice %4 {offsets = [0, 0], sizes = [4, 495], strides = [1, 1]} : vector<4x512xf32> to vector<4x495xf32>
    %39 = tpu.concatenate %37, %38 in 1 : vector<4x17xf32>, vector<4x495xf32> -> vector<4x512xf32>
    %40 = vector.broadcast %29 : vector<1x512xf32> to vector<4x512xf32>
    %41 = arith.mulf %39, %40 : vector<4x512xf32>
    %c0_7 = arith.constant 0 : index
    %c0_8 = arith.constant 0 : index
    %42 = vector.load %arg9[%c0_7, %c0_8] : memref<36x512xf32, #tpu.memory_space<vmem>>, vector<4x512xf32>
    tpu.vector_store %arg9[%c0_7, %c0_8], %41 {strides = array<i32>} : memref<36x512xf32, #tpu.memory_space<vmem>>, vector<4x512xf32>,
    %43 = vector.extract_strided_slice %4 {offsets = [0, 496], sizes = [4, 16], strides = [1, 1]} : vector<4x512xf32> to vector<4x16xf32>
    %44 = vector.extract_strided_slice %4 {offsets = [0, 0], sizes = [4, 496], strides = [1, 1]} : vector<4x512xf32> to vector<4x496xf32>
    %45 = tpu.concatenate %43, %44 in 1 : vector<4x16xf32>, vector<4x496xf32> -> vector<4x512xf32>
    %46 = vector.broadcast %30 : vector<1x512xf32> to vector<4x512xf32>
    %47 = arith.mulf %45, %46 : vector<4x512xf32>
    %c4 = arith.constant 4 : index
    %c0_9 = arith.constant 0 : index
    %48 = vector.load %arg9[%c4, %c0_9] : memref<36x512xf32, #tpu.memory_space<vmem>>, vector<4x512xf32>
    tpu.vector_store %arg9[%c4, %c0_9], %47 {strides = array<i32>} : memref<36x512xf32, #tpu.memory_space<vmem>>, vector<4x512xf32>,
    %49 = vector.extract_strided_slice %4 {offsets = [0, 497], sizes = [4, 15], strides = [1, 1]} : vector<4x512xf32> to vector<4x15xf32>
    %50 = vector.extract_strided_slice %4 {offsets = [0, 0], sizes = [4, 497], strides = [1, 1]} : vector<4x512xf32> to vector<4x497xf32>
    %51 = tpu.concatenate %49, %50 in 1 : vector<4x15xf32>, vector<4x497xf32> -> vector<4x512xf32>
    %52 = vector.broadcast %31 : vector<1x512xf32> to vector<4x512xf32>
    %53 = arith.mulf %51, %52 : vector<4x512xf32>
    %c8 = arith.constant 8 : index
    %c0_10 = arith.constant 0 : index
    %54 = vector.load %arg9[%c8, %c0_10] : memref<36x512xf32, #tpu.memory_space<vmem>>, vector<4x512xf32>
    tpu.vector_store %arg9[%c8, %c0_10], %53 {strides = array<i32>} : memref<36x512xf32, #tpu.memory_space<vmem>>, vector<4x512xf32>,
    %55 = vector.extract_strided_slice %4 {offsets = [0, 511], sizes = [4, 1], strides = [1, 1]} : vector<4x512xf32> to vector<4x1xf32>
    %56 = vector.extract_strided_slice %4 {offsets = [0, 0], sizes = [4, 511], strides = [1, 1]} : vector<4x512xf32> to vector<4x511xf32>
    %57 = tpu.concatenate %55, %56 in 1 : vector<4x1xf32>, vector<4x511xf32> -> vector<4x512xf32>
    %58 = vector.broadcast %32 : vector<1x512xf32> to vector<4x512xf32>
    %59 = arith.mulf %57, %58 : vector<4x512xf32>
    %c12 = arith.constant 12 : index
    %c0_11 = arith.constant 0 : index
    %60 = vector.load %arg9[%c12, %c0_11] : memref<36x512xf32, #tpu.memory_space<vmem>>, vector<4x512xf32>
    tpu.vector_store %arg9[%c12, %c0_11], %59 {strides = array<i32>} : memref<36x512xf32, #tpu.memory_space<vmem>>, vector<4x512xf32>,
    %c16 = arith.constant 16 : index
    %c0_12 = arith.constant 0 : index
    %61 = vector.load %arg9[%c16, %c0_12] : memref<36x512xf32, #tpu.memory_space<vmem>>, vector<4x512xf32>
    tpu.vector_store %arg9[%c16, %c0_12], %4 {strides = array<i32>} : memref<36x512xf32, #tpu.memory_space<vmem>>, vector<4x512xf32>,
    %62 = vector.extract_strided_slice %4 {offsets = [0, 1], sizes = [4, 511], strides = [1, 1]} : vector<4x512xf32> to vector<4x511xf32>
    %63 = vector.extract_strided_slice %4 {offsets = [0, 0], sizes = [4, 1], strides = [1, 1]} : vector<4x512xf32> to vector<4x1xf32>
    %64 = tpu.concatenate %62, %63 in 1 : vector<4x511xf32>, vector<4x1xf32> -> vector<4x512xf32>
    %65 = vector.broadcast %33 : vector<1x512xf32> to vector<4x512xf32>
    %66 = arith.mulf %64, %65 : vector<4x512xf32>
    %c20 = arith.constant 20 : index
    %c0_13 = arith.constant 0 : index
    %67 = vector.load %arg9[%c20, %c0_13] : memref<36x512xf32, #tpu.memory_space<vmem>>, vector<4x512xf32>
    tpu.vector_store %arg9[%c20, %c0_13], %66 {strides = array<i32>} : memref<36x512xf32, #tpu.memory_space<vmem>>, vector<4x512xf32>,
    %68 = vector.extract_strided_slice %4 {offsets = [0, 15], sizes = [4, 497], strides = [1, 1]} : vector<4x512xf32> to vector<4x497xf32>
    %69 = vector.extract_strided_slice %4 {offsets = [0, 0], sizes = [4, 15], strides = [1, 1]} : vector<4x512xf32> to vector<4x15xf32>
    %70 = tpu.concatenate %68, %69 in 1 : vector<4x497xf32>, vector<4x15xf32> -> vector<4x512xf32>
    %71 = vector.broadcast %34 : vector<1x512xf32> to vector<4x512xf32>
    %72 = arith.mulf %70, %71 : vector<4x512xf32>
    %c24 = arith.constant 24 : index
    %c0_14 = arith.constant 0 : index
    %73 = vector.load %arg9[%c24, %c0_14] : memref<36x512xf32, #tpu.memory_space<vmem>>, vector<4x512xf32>
    tpu.vector_store %arg9[%c24, %c0_14], %72 {strides = array<i32>} : memref<36x512xf32, #tpu.memory_space<vmem>>, vector<4x512xf32>,
    %74 = vector.extract_strided_slice %4 {offsets = [0, 16], sizes = [4, 496], strides = [1, 1]} : vector<4x512xf32> to vector<4x496xf32>
    %75 = vector.extract_strided_slice %4 {offsets = [0, 0], sizes = [4, 16], strides = [1, 1]} : vector<4x512xf32> to vector<4x16xf32>
    %76 = tpu.concatenate %74, %75 in 1 : vector<4x496xf32>, vector<4x16xf32> -> vector<4x512xf32>
    %77 = vector.broadcast %35 : vector<1x512xf32> to vector<4x512xf32>
    %78 = arith.mulf %76, %77 : vector<4x512xf32>
    %c28 = arith.constant 28 : index
    %c0_15 = arith.constant 0 : index
    %79 = vector.load %arg9[%c28, %c0_15] : memref<36x512xf32, #tpu.memory_space<vmem>>, vector<4x512xf32>
    tpu.vector_store %arg9[%c28, %c0_15], %78 {strides = array<i32>} : memref<36x512xf32, #tpu.memory_space<vmem>>, vector<4x512xf32>,
    %80 = vector.extract_strided_slice %4 {offsets = [0, 17], sizes = [4, 495], strides = [1, 1]} : vector<4x512xf32> to vector<4x495xf32>
    %81 = vector.extract_strided_slice %4 {offsets = [0, 0], sizes = [4, 17], strides = [1, 1]} : vector<4x512xf32> to vector<4x17xf32>
    %82 = tpu.concatenate %80, %81 in 1 : vector<4x495xf32>, vector<4x17xf32> -> vector<4x512xf32>
    %83 = vector.broadcast %36 : vector<1x512xf32> to vector<4x512xf32>
    %84 = arith.mulf %82, %83 : vector<4x512xf32>
    %c32 = arith.constant 32 : index
    %c0_16 = arith.constant 0 : index
    %85 = vector.load %arg9[%c32, %c0_16] : memref<36x512xf32, #tpu.memory_space<vmem>>, vector<4x512xf32>
    tpu.vector_store %arg9[%c32, %c0_16], %84 {strides = array<i32>} : memref<36x512xf32, #tpu.memory_space<vmem>>, vector<4x512xf32>,
    %c0_17 = arith.constant 0 : index
    %c0_18 = arith.constant 0 : index
    %86 = vector.load %arg9[%c0_17, %c0_18] : memref<36x512xf32, #tpu.memory_space<vmem>>, vector<36x512xf32>
    %87 = arith.truncf %86 : vector<36x512xf32> to vector<36x512xbf16>
    %c0_19 = arith.constant 0 : index
    %c0_20 = arith.constant 0 : index
    %88 = vector.load %arg1[%c0_19, %c0_20] : memref<8x36xbf16, #tpu.memory_space<vmem>>, vector<8x36xbf16>
    %cst_21 = arith.constant dense<0.000000e+00> : vector<8x512xf32>
    %89 = tpu.matmul %88, %87, %cst_21 {dimension_numbers = #tpu.dot_dimension_numbers<[1], [0], [0], [1], [0, 0, 1, 1], [], []>} : vector<8x36xbf16>, vector<36x512xbf16>, vector<8x512xf32> -> vector<8x512xf32>
    %cst_22 = arith.constant dense<0.000000e+00> : vector<8xf32>
    %90 = vector.multi_reduction <add>, %89, %cst_22 [1] : vector<8x512xf32> to vector<8xf32>
    %91 = vector.shape_cast %90 : vector<8xf32> to vector<8x1xf32>
    %cst_23 = arith.constant 5.120000e+02 : f32
    %92 = vector.broadcast %cst_23 : f32 to vector<8x1xf32>
    %93 = arith.divf %91, %92 : vector<8x1xf32>
    %94 = vector.broadcast %93 : vector<8x1xf32> to vector<8x512xf32>
    %95 = arith.subf %89, %94 : vector<8x512xf32>
    %96 = arith.mulf %95, %95 : vector<8x512xf32>
    %cst_24 = arith.constant dense<0.000000e+00> : vector<8xf32>
    %97 = vector.multi_reduction <add>, %96, %cst_24 [1] : vector<8x512xf32> to vector<8xf32>
    %98 = vector.shape_cast %97 : vector<8xf32> to vector<8x1xf32>
    %cst_25 = arith.constant 5.120000e+02 : f32
    %99 = vector.broadcast %cst_25 : f32 to vector<8x1xf32>
    %100 = arith.divf %98, %99 : vector<8x1xf32>
    %cst_26 = arith.constant 9.99999974E-6 : f32
    %101 = vector.broadcast %cst_26 : f32 to vector<8x1xf32>
    %102 = arith.addf %100, %101 : vector<8x1xf32>
    %103 = math.rsqrt %102 : vector<8x1xf32>
    %104 = vector.broadcast %103 : vector<8x1xf32> to vector<8x512xf32>
    %105 = arith.mulf %95, %104 : vector<8x512xf32>
    %c0_27 = arith.constant 0 : index
    %c0_28 = arith.constant 0 : index
    %106 = vector.load %arg2[%c0_27, %c0_28] : memref<8x1xf32, #tpu.memory_space<vmem>>, vector<8x1xf32>
    %107 = vector.broadcast %106 : vector<8x1xf32> to vector<8x512xf32>
    %108 = arith.mulf %105, %107 : vector<8x512xf32>
    %c0_29 = arith.constant 0 : index
    %c0_30 = arith.constant 0 : index
    %109 = vector.load %arg3[%c0_29, %c0_30] : memref<8x1xf32, #tpu.memory_space<vmem>>, vector<8x1xf32>
    %110 = vector.broadcast %109 : vector<8x1xf32> to vector<8x512xf32>
    %111 = arith.addf %108, %110 : vector<8x512xf32>
    %112 = vector.extract_strided_slice %111 {offsets = [0, 0], sizes = [4, 512], strides = [1, 1]} : vector<8x512xf32> to vector<4x512xf32>
    %113 = vector.extract_strided_slice %111 {offsets = [4, 0], sizes = [4, 512], strides = [1, 1]} : vector<8x512xf32> to vector<4x512xf32>
    %114 = arith.negf %113 : vector<4x512xf32>
    %115 = math.exp %114 : vector<4x512xf32>
    %cst_31 = arith.constant 1.000000e+00 : f32
    %116 = vector.broadcast %cst_31 : f32 to vector<4x512xf32>
    %117 = arith.addf %116, %115 : vector<4x512xf32>
    %118 = arith.divf %116, %117 : vector<4x512xf32>
    %119 = arith.mulf %112, %118 : vector<4x512xf32>
    %120 = vector.extract_strided_slice %119 {offsets = [0, 495], sizes = [4, 17], strides = [1, 1]} : vector<4x512xf32> to vector<4x17xf32>
    %121 = vector.extract_strided_slice %119 {offsets = [0, 0], sizes = [4, 495], strides = [1, 1]} : vector<4x512xf32> to vector<4x495xf32>
    %122 = tpu.concatenate %120, %121 in 1 : vector<4x17xf32>, vector<4x495xf32> -> vector<4x512xf32>
    %123 = vector.broadcast %29 : vector<1x512xf32> to vector<4x512xf32>
    %124 = arith.mulf %122, %123 : vector<4x512xf32>
    %c0_32 = arith.constant 0 : index
    %c0_33 = arith.constant 0 : index
    %125 = vector.load %arg9[%c0_32, %c0_33] : memref<36x512xf32, #tpu.memory_space<vmem>>, vector<4x512xf32>
    tpu.vector_store %arg9[%c0_32, %c0_33], %124 {strides = array<i32>} : memref<36x512xf32, #tpu.memory_space<vmem>>, vector<4x512xf32>,
    %126 = vector.extract_strided_slice %119 {offsets = [0, 496], sizes = [4, 16], strides = [1, 1]} : vector<4x512xf32> to vector<4x16xf32>
    %127 = vector.extract_strided_slice %119 {offsets = [0, 0], sizes = [4, 496], strides = [1, 1]} : vector<4x512xf32> to vector<4x496xf32>
    %128 = tpu.concatenate %126, %127 in 1 : vector<4x16xf32>, vector<4x496xf32> -> vector<4x512xf32>
    %129 = vector.broadcast %30 : vector<1x512xf32> to vector<4x512xf32>
    %130 = arith.mulf %128, %129 : vector<4x512xf32>
    %c4_34 = arith.constant 4 : index
    %c0_35 = arith.constant 0 : index
    %131 = vector.load %arg9[%c4_34, %c0_35] : memref<36x512xf32, #tpu.memory_space<vmem>>, vector<4x512xf32>
    tpu.vector_store %arg9[%c4_34, %c0_35], %130 {strides = array<i32>} : memref<36x512xf32, #tpu.memory_space<vmem>>, vector<4x512xf32>,
    %132 = vector.extract_strided_slice %119 {offsets = [0, 497], sizes = [4, 15], strides = [1, 1]} : vector<4x512xf32> to vector<4x15xf32>
    %133 = vector.extract_strided_slice %119 {offsets = [0, 0], sizes = [4, 497], strides = [1, 1]} : vector<4x512xf32> to vector<4x497xf32>
    %134 = tpu.concatenate %132, %133 in 1 : vector<4x15xf32>, vector<4x497xf32> -> vector<4x512xf32>
    %135 = vector.broadcast %31 : vector<1x512xf32> to vector<4x512xf32>
    %136 = arith.mulf %134, %135 : vector<4x512xf32>
    %c8_36 = arith.constant 8 : index
    %c0_37 = arith.constant 0 : index
    %137 = vector.load %arg9[%c8_36, %c0_37] : memref<36x512xf32, #tpu.memory_space<vmem>>, vector<4x512xf32>
    tpu.vector_store %arg9[%c8_36, %c0_37], %136 {strides = array<i32>} : memref<36x512xf32, #tpu.memory_space<vmem>>, vector<4x512xf32>,
    %138 = vector.extract_strided_slice %119 {offsets = [0, 511], sizes = [4, 1], strides = [1, 1]} : vector<4x512xf32> to vector<4x1xf32>
    %139 = vector.extract_strided_slice %119 {offsets = [0, 0], sizes = [4, 511], strides = [1, 1]} : vector<4x512xf32> to vector<4x511xf32>
    %140 = tpu.concatenate %138, %139 in 1 : vector<4x1xf32>, vector<4x511xf32> -> vector<4x512xf32>
    %141 = vector.broadcast %32 : vector<1x512xf32> to vector<4x512xf32>
    %142 = arith.mulf %140, %141 : vector<4x512xf32>
    %c12_38 = arith.constant 12 : index
    %c0_39 = arith.constant 0 : index
    %143 = vector.load %arg9[%c12_38, %c0_39] : memref<36x512xf32, #tpu.memory_space<vmem>>, vector<4x512xf32>
    tpu.vector_store %arg9[%c12_38, %c0_39], %142 {strides = array<i32>} : memref<36x512xf32, #tpu.memory_space<vmem>>, vector<4x512xf32>,
    %c16_40 = arith.constant 16 : index
    %c0_41 = arith.constant 0 : index
    %144 = vector.load %arg9[%c16_40, %c0_41] : memref<36x512xf32, #tpu.memory_space<vmem>>, vector<4x512xf32>
    tpu.vector_store %arg9[%c16_40, %c0_41], %119 {strides = array<i32>} : memref<36x512xf32, #tpu.memory_space<vmem>>, vector<4x512xf32>,
    %145 = vector.extract_strided_slice %119 {offsets = [0, 1], sizes = [4, 511], strides = [1, 1]} : vector<4x512xf32> to vector<4x511xf32>
    %146 = vector.extract_strided_slice %119 {offsets = [0, 0], sizes = [4, 1], strides = [1, 1]} : vector<4x512xf32> to vector<4x1xf32>
    %147 = tpu.concatenate %145, %146 in 1 : vector<4x511xf32>, vector<4x1xf32> -> vector<4x512xf32>
    %148 = vector.broadcast %33 : vector<1x512xf32> to vector<4x512xf32>
    %149 = arith.mulf %147, %148 : vector<4x512xf32>
    %c20_42 = arith.constant 20 : index
    %c0_43 = arith.constant 0 : index
    %150 = vector.load %arg9[%c20_42, %c0_43] : memref<36x512xf32, #tpu.memory_space<vmem>>, vector<4x512xf32>
    tpu.vector_store %arg9[%c20_42, %c0_43], %149 {strides = array<i32>} : memref<36x512xf32, #tpu.memory_space<vmem>>, vector<4x512xf32>,
    %151 = vector.extract_strided_slice %119 {offsets = [0, 15], sizes = [4, 497], strides = [1, 1]} : vector<4x512xf32> to vector<4x497xf32>
    %152 = vector.extract_strided_slice %119 {offsets = [0, 0], sizes = [4, 15], strides = [1, 1]} : vector<4x512xf32> to vector<4x15xf32>
    %153 = tpu.concatenate %151, %152 in 1 : vector<4x497xf32>, vector<4x15xf32> -> vector<4x512xf32>
    %154 = vector.broadcast %34 : vector<1x512xf32> to vector<4x512xf32>
    %155 = arith.mulf %153, %154 : vector<4x512xf32>
    %c24_44 = arith.constant 24 : index
    %c0_45 = arith.constant 0 : index
    %156 = vector.load %arg9[%c24_44, %c0_45] : memref<36x512xf32, #tpu.memory_space<vmem>>, vector<4x512xf32>
    tpu.vector_store %arg9[%c24_44, %c0_45], %155 {strides = array<i32>} : memref<36x512xf32, #tpu.memory_space<vmem>>, vector<4x512xf32>,
    %157 = vector.extract_strided_slice %119 {offsets = [0, 16], sizes = [4, 496], strides = [1, 1]} : vector<4x512xf32> to vector<4x496xf32>
    %158 = vector.extract_strided_slice %119 {offsets = [0, 0], sizes = [4, 16], strides = [1, 1]} : vector<4x512xf32> to vector<4x16xf32>
    %159 = tpu.concatenate %157, %158 in 1 : vector<4x496xf32>, vector<4x16xf32> -> vector<4x512xf32>
    %160 = vector.broadcast %35 : vector<1x512xf32> to vector<4x512xf32>
    %161 = arith.mulf %159, %160 : vector<4x512xf32>
    %c28_46 = arith.constant 28 : index
    %c0_47 = arith.constant 0 : index
    %162 = vector.load %arg9[%c28_46, %c0_47] : memref<36x512xf32, #tpu.memory_space<vmem>>, vector<4x512xf32>
    tpu.vector_store %arg9[%c28_46, %c0_47], %161 {strides = array<i32>} : memref<36x512xf32, #tpu.memory_space<vmem>>, vector<4x512xf32>,
    %163 = vector.extract_strided_slice %119 {offsets = [0, 17], sizes = [4, 495], strides = [1, 1]} : vector<4x512xf32> to vector<4x495xf32>
    %164 = vector.extract_strided_slice %119 {offsets = [0, 0], sizes = [4, 17], strides = [1, 1]} : vector<4x512xf32> to vector<4x17xf32>
    %165 = tpu.concatenate %163, %164 in 1 : vector<4x495xf32>, vector<4x17xf32> -> vector<4x512xf32>
    %166 = vector.broadcast %36 : vector<1x512xf32> to vector<4x512xf32>
    %167 = arith.mulf %165, %166 : vector<4x512xf32>
    %c32_48 = arith.constant 32 : index
    %c0_49 = arith.constant 0 : index
    %168 = vector.load %arg9[%c32_48, %c0_49] : memref<36x512xf32, #tpu.memory_space<vmem>>, vector<4x512xf32>
    tpu.vector_store %arg9[%c32_48, %c0_49], %167 {strides = array<i32>} : memref<36x512xf32, #tpu.memory_space<vmem>>, vector<4x512xf32>,
    %c0_50 = arith.constant 0 : index
    %c0_51 = arith.constant 0 : index
    %169 = vector.load %arg9[%c0_50, %c0_51] : memref<36x512xf32, #tpu.memory_space<vmem>>, vector<36x512xf32>
    %170 = arith.truncf %169 : vector<36x512xf32> to vector<36x512xbf16>
    %c0_52 = arith.constant 0 : index
    %c0_53 = arith.constant 0 : index
    %171 = vector.load %arg4[%c0_52, %c0_53] : memref<8x36xbf16, #tpu.memory_space<vmem>>, vector<8x36xbf16>
    %cst_54 = arith.constant dense<0.000000e+00> : vector<8x512xf32>
    %172 = tpu.matmul %171, %170, %cst_54 {dimension_numbers = #tpu.dot_dimension_numbers<[1], [0], [0], [1], [0, 0, 1, 1], [], []>} : vector<8x36xbf16>, vector<36x512xbf16>, vector<8x512xf32> -> vector<8x512xf32>
    %cst_55 = arith.constant dense<0.000000e+00> : vector<8xf32>
    %173 = vector.multi_reduction <add>, %172, %cst_55 [1] : vector<8x512xf32> to vector<8xf32>
    %174 = vector.shape_cast %173 : vector<8xf32> to vector<8x1xf32>
    %cst_56 = arith.constant 5.120000e+02 : f32
    %175 = vector.broadcast %cst_56 : f32 to vector<8x1xf32>
    %176 = arith.divf %174, %175 : vector<8x1xf32>
    %177 = vector.broadcast %176 : vector<8x1xf32> to vector<8x512xf32>
    %178 = arith.subf %172, %177 : vector<8x512xf32>
    %179 = arith.mulf %178, %178 : vector<8x512xf32>
    %cst_57 = arith.constant dense<0.000000e+00> : vector<8xf32>
    %180 = vector.multi_reduction <add>, %179, %cst_57 [1] : vector<8x512xf32> to vector<8xf32>
    %181 = vector.shape_cast %180 : vector<8xf32> to vector<8x1xf32>
    %cst_58 = arith.constant 5.120000e+02 : f32
    %182 = vector.broadcast %cst_58 : f32 to vector<8x1xf32>
    %183 = arith.divf %181, %182 : vector<8x1xf32>
    %cst_59 = arith.constant 9.99999974E-6 : f32
    %184 = vector.broadcast %cst_59 : f32 to vector<8x1xf32>
    %185 = arith.addf %183, %184 : vector<8x1xf32>
    %186 = math.rsqrt %185 : vector<8x1xf32>
    %187 = vector.broadcast %186 : vector<8x1xf32> to vector<8x512xf32>
    %188 = arith.mulf %178, %187 : vector<8x512xf32>
    %c0_60 = arith.constant 0 : index
    %c0_61 = arith.constant 0 : index
    %189 = vector.load %arg5[%c0_60, %c0_61] : memref<8x1xf32, #tpu.memory_space<vmem>>, vector<8x1xf32>
    %190 = vector.broadcast %189 : vector<8x1xf32> to vector<8x512xf32>
    %191 = arith.mulf %188, %190 : vector<8x512xf32>
    %c0_62 = arith.constant 0 : index
    %c0_63 = arith.constant 0 : index
    %192 = vector.load %arg6[%c0_62, %c0_63] : memref<8x1xf32, #tpu.memory_space<vmem>>, vector<8x1xf32>
    %193 = vector.broadcast %192 : vector<8x1xf32> to vector<8x512xf32>
    %194 = arith.addf %191, %193 : vector<8x512xf32>
    %195 = vector.extract_strided_slice %194 {offsets = [0, 0], sizes = [4, 512], strides = [1, 1]} : vector<8x512xf32> to vector<4x512xf32>
    %196 = vector.extract_strided_slice %194 {offsets = [4, 0], sizes = [4, 512], strides = [1, 1]} : vector<8x512xf32> to vector<4x512xf32>
    %197 = arith.negf %196 : vector<4x512xf32>
    %198 = math.exp %197 : vector<4x512xf32>
    %cst_64 = arith.constant 1.000000e+00 : f32
    %199 = vector.broadcast %cst_64 : f32 to vector<4x512xf32>
    %200 = arith.addf %199, %198 : vector<4x512xf32>
    %201 = arith.divf %199, %200 : vector<4x512xf32>
    %202 = arith.mulf %195, %201 : vector<4x512xf32>
    %203 = vector.extract_strided_slice %202 {offsets = [0, 495], sizes = [4, 17], strides = [1, 1]} : vector<4x512xf32> to vector<4x17xf32>
    %204 = vector.extract_strided_slice %202 {offsets = [0, 0], sizes = [4, 495], strides = [1, 1]} : vector<4x512xf32> to vector<4x495xf32>
    %205 = tpu.concatenate %203, %204 in 1 : vector<4x17xf32>, vector<4x495xf32> -> vector<4x512xf32>
    %206 = vector.broadcast %29 : vector<1x512xf32> to vector<4x512xf32>
    %207 = arith.mulf %205, %206 : vector<4x512xf32>
    %c0_65 = arith.constant 0 : index
    %c0_66 = arith.constant 0 : index
    %208 = vector.load %arg9[%c0_65, %c0_66] : memref<36x512xf32, #tpu.memory_space<vmem>>, vector<4x512xf32>
    tpu.vector_store %arg9[%c0_65, %c0_66], %207 {strides = array<i32>} : memref<36x512xf32, #tpu.memory_space<vmem>>, vector<4x512xf32>,
    %209 = vector.extract_strided_slice %202 {offsets = [0, 496], sizes = [4, 16], strides = [1, 1]} : vector<4x512xf32> to vector<4x16xf32>
    %210 = vector.extract_strided_slice %202 {offsets = [0, 0], sizes = [4, 496], strides = [1, 1]} : vector<4x512xf32> to vector<4x496xf32>
    %211 = tpu.concatenate %209, %210 in 1 : vector<4x16xf32>, vector<4x496xf32> -> vector<4x512xf32>
    %212 = vector.broadcast %30 : vector<1x512xf32> to vector<4x512xf32>
    %213 = arith.mulf %211, %212 : vector<4x512xf32>
    %c4_67 = arith.constant 4 : index
    %c0_68 = arith.constant 0 : index
    %214 = vector.load %arg9[%c4_67, %c0_68] : memref<36x512xf32, #tpu.memory_space<vmem>>, vector<4x512xf32>
    tpu.vector_store %arg9[%c4_67, %c0_68], %213 {strides = array<i32>} : memref<36x512xf32, #tpu.memory_space<vmem>>, vector<4x512xf32>,
    %215 = vector.extract_strided_slice %202 {offsets = [0, 497], sizes = [4, 15], strides = [1, 1]} : vector<4x512xf32> to vector<4x15xf32>
    %216 = vector.extract_strided_slice %202 {offsets = [0, 0], sizes = [4, 497], strides = [1, 1]} : vector<4x512xf32> to vector<4x497xf32>
    %217 = tpu.concatenate %215, %216 in 1 : vector<4x15xf32>, vector<4x497xf32> -> vector<4x512xf32>
    %218 = vector.broadcast %31 : vector<1x512xf32> to vector<4x512xf32>
    %219 = arith.mulf %217, %218 : vector<4x512xf32>
    %c8_69 = arith.constant 8 : index
    %c0_70 = arith.constant 0 : index
    %220 = vector.load %arg9[%c8_69, %c0_70] : memref<36x512xf32, #tpu.memory_space<vmem>>, vector<4x512xf32>
    tpu.vector_store %arg9[%c8_69, %c0_70], %219 {strides = array<i32>} : memref<36x512xf32, #tpu.memory_space<vmem>>, vector<4x512xf32>,
    %221 = vector.extract_strided_slice %202 {offsets = [0, 511], sizes = [4, 1], strides = [1, 1]} : vector<4x512xf32> to vector<4x1xf32>
    %222 = vector.extract_strided_slice %202 {offsets = [0, 0], sizes = [4, 511], strides = [1, 1]} : vector<4x512xf32> to vector<4x511xf32>
    %223 = tpu.concatenate %221, %222 in 1 : vector<4x1xf32>, vector<4x511xf32> -> vector<4x512xf32>
    %224 = vector.broadcast %32 : vector<1x512xf32> to vector<4x512xf32>
    %225 = arith.mulf %223, %224 : vector<4x512xf32>
    %c12_71 = arith.constant 12 : index
    %c0_72 = arith.constant 0 : index
    %226 = vector.load %arg9[%c12_71, %c0_72] : memref<36x512xf32, #tpu.memory_space<vmem>>, vector<4x512xf32>
    tpu.vector_store %arg9[%c12_71, %c0_72], %225 {strides = array<i32>} : memref<36x512xf32, #tpu.memory_space<vmem>>, vector<4x512xf32>,
    %c16_73 = arith.constant 16 : index
    %c0_74 = arith.constant 0 : index
    %227 = vector.load %arg9[%c16_73, %c0_74] : memref<36x512xf32, #tpu.memory_space<vmem>>, vector<4x512xf32>
    tpu.vector_store %arg9[%c16_73, %c0_74], %202 {strides = array<i32>} : memref<36x512xf32, #tpu.memory_space<vmem>>, vector<4x512xf32>,
    %228 = vector.extract_strided_slice %202 {offsets = [0, 1], sizes = [4, 511], strides = [1, 1]} : vector<4x512xf32> to vector<4x511xf32>
    %229 = vector.extract_strided_slice %202 {offsets = [0, 0], sizes = [4, 1], strides = [1, 1]} : vector<4x512xf32> to vector<4x1xf32>
    %230 = tpu.concatenate %228, %229 in 1 : vector<4x511xf32>, vector<4x1xf32> -> vector<4x512xf32>
    %231 = vector.broadcast %33 : vector<1x512xf32> to vector<4x512xf32>
    %232 = arith.mulf %230, %231 : vector<4x512xf32>
    %c20_75 = arith.constant 20 : index
    %c0_76 = arith.constant 0 : index
    %233 = vector.load %arg9[%c20_75, %c0_76] : memref<36x512xf32, #tpu.memory_space<vmem>>, vector<4x512xf32>
    tpu.vector_store %arg9[%c20_75, %c0_76], %232 {strides = array<i32>} : memref<36x512xf32, #tpu.memory_space<vmem>>, vector<4x512xf32>,
    %234 = vector.extract_strided_slice %202 {offsets = [0, 15], sizes = [4, 497], strides = [1, 1]} : vector<4x512xf32> to vector<4x497xf32>
    %235 = vector.extract_strided_slice %202 {offsets = [0, 0], sizes = [4, 15], strides = [1, 1]} : vector<4x512xf32> to vector<4x15xf32>
    %236 = tpu.concatenate %234, %235 in 1 : vector<4x497xf32>, vector<4x15xf32> -> vector<4x512xf32>
    %237 = vector.broadcast %34 : vector<1x512xf32> to vector<4x512xf32>
    %238 = arith.mulf %236, %237 : vector<4x512xf32>
    %c24_77 = arith.constant 24 : index
    %c0_78 = arith.constant 0 : index
    %239 = vector.load %arg9[%c24_77, %c0_78] : memref<36x512xf32, #tpu.memory_space<vmem>>, vector<4x512xf32>
    tpu.vector_store %arg9[%c24_77, %c0_78], %238 {strides = array<i32>} : memref<36x512xf32, #tpu.memory_space<vmem>>, vector<4x512xf32>,
    %240 = vector.extract_strided_slice %202 {offsets = [0, 16], sizes = [4, 496], strides = [1, 1]} : vector<4x512xf32> to vector<4x496xf32>
    %241 = vector.extract_strided_slice %202 {offsets = [0, 0], sizes = [4, 16], strides = [1, 1]} : vector<4x512xf32> to vector<4x16xf32>
    %242 = tpu.concatenate %240, %241 in 1 : vector<4x496xf32>, vector<4x16xf32> -> vector<4x512xf32>
    %243 = vector.broadcast %35 : vector<1x512xf32> to vector<4x512xf32>
    %244 = arith.mulf %242, %243 : vector<4x512xf32>
    %c28_79 = arith.constant 28 : index
    %c0_80 = arith.constant 0 : index
    %245 = vector.load %arg9[%c28_79, %c0_80] : memref<36x512xf32, #tpu.memory_space<vmem>>, vector<4x512xf32>
    tpu.vector_store %arg9[%c28_79, %c0_80], %244 {strides = array<i32>} : memref<36x512xf32, #tpu.memory_space<vmem>>, vector<4x512xf32>,
    %246 = vector.extract_strided_slice %202 {offsets = [0, 17], sizes = [4, 495], strides = [1, 1]} : vector<4x512xf32> to vector<4x495xf32>
    %247 = vector.extract_strided_slice %202 {offsets = [0, 0], sizes = [4, 17], strides = [1, 1]} : vector<4x512xf32> to vector<4x17xf32>
    %248 = tpu.concatenate %246, %247 in 1 : vector<4x495xf32>, vector<4x17xf32> -> vector<4x512xf32>
    %249 = vector.broadcast %36 : vector<1x512xf32> to vector<4x512xf32>
    %250 = arith.mulf %248, %249 : vector<4x512xf32>
    %c32_81 = arith.constant 32 : index
    %c0_82 = arith.constant 0 : index
    %251 = vector.load %arg9[%c32_81, %c0_82] : memref<36x512xf32, #tpu.memory_space<vmem>>, vector<4x512xf32>
    tpu.vector_store %arg9[%c32_81, %c0_82], %250 {strides = array<i32>} : memref<36x512xf32, #tpu.memory_space<vmem>>, vector<4x512xf32>,
    %c0_83 = arith.constant 0 : index
    %c0_84 = arith.constant 0 : index
    %252 = vector.load %arg9[%c0_83, %c0_84] : memref<36x512xf32, #tpu.memory_space<vmem>>, vector<36x512xf32>
    %253 = arith.truncf %252 : vector<36x512xf32> to vector<36x512xbf16>
    %c0_85 = arith.constant 0 : index
    %c0_86 = arith.constant 0 : index
    %254 = vector.load %arg7[%c0_85, %c0_86] : memref<4x36xbf16, #tpu.memory_space<vmem>>, vector<4x36xbf16>
    %cst_87 = arith.constant dense<0.000000e+00> : vector<4x512xf32>
    %255 = tpu.matmul %254, %253, %cst_87 {dimension_numbers = #tpu.dot_dimension_numbers<[1], [0], [0], [1], [0, 0, 1, 1], [], []>} : vector<4x36xbf16>, vector<36x512xbf16>, vector<4x512xf32> -> vector<4x512xf32>
    %256 = arith.addf %255, %4 : vector<4x512xf32>
    %257 = vector.extract_strided_slice %256 {offsets = [0, 0], sizes = [4, 256], strides = [1, 1]} : vector<4x512xf32> to vector<4x256xf32>
    %c0_88 = arith.constant 0 : index
    %c0_89 = arith.constant 0 : index
    %c0_90 = arith.constant 0 : index
    %258 = vector.load %arg8[%c0_88, %c0_89, %c0_90] : memref<2x4x256xf32, #tpu.memory_space<vmem>>, vector<1x4x256xf32>
    %259 = vector.shape_cast %258 : vector<1x4x256xf32> to vector<4x256xf32>
    %260 = vector.shape_cast %257 : vector<4x256xf32> to vector<1x4x256xf32>
    tpu.vector_store %arg8[%c0_88, %c0_89, %c0_90], %260 {strides = array<i32>} : memref<2x4x256xf32, #tpu.memory_space<vmem>>, vector<1x4x256xf32>,
    %261 = vector.extract_strided_slice %256 {offsets = [0, 256], sizes = [4, 256], strides = [1, 1]} : vector<4x512xf32> to vector<4x256xf32>
    %c1_91 = arith.constant 1 : index
    %c0_92 = arith.constant 0 : index
    %c0_93 = arith.constant 0 : index
    %262 = vector.load %arg8[%c1_91, %c0_92, %c0_93] : memref<2x4x256xf32, #tpu.memory_space<vmem>>, vector<1x4x256xf32>
    %263 = vector.shape_cast %262 : vector<1x4x256xf32> to vector<4x256xf32>
    %264 = vector.shape_cast %261 : vector<4x256xf32> to vector<1x4x256xf32>
    tpu.vector_store %arg8[%c1_91, %c0_92, %c0_93], %264 {strides = array<i32>} : memref<2x4x256xf32, #tpu.memory_space<vmem>>, vector<1x4x256xf32>,
    return
  }
}

</mosaic_0001>

<llo_original>
// kernel: resblock_forward.1
$region0: #{resblock_forward.1}
  #allocation0 [shape = 'u32[]', space=smem, size = 0x4, offset = 0x4, fixed_abs, tag = 'smem constant byte address 0x4 - core index']
  #allocation1 [shape = 'u32[144,128]{1,0:T(1,128)}', space=vmem, size = 0x12000, scoped, tag = 'internal scratch']
  #allocation2 [shape = 'f32[36,512]{1,0:T(8,128)}', space=vmem, size = 0x14000, scoped, tag = 'scratch operand']
  %s0 = inlined_call_operand.vmem [shape: f32[2,4,256], index: 0, kind: input, shape index: {}]
  %s1 = inlined_call_operand.vmem [shape: bf16[8,36], index: 1, kind: input, shape index: {}]
  %s2 = inlined_call_operand.vmem [shape: f32[8,1], index: 2, kind: input, shape index: {}]
  %s3 = inlined_call_operand.vmem [shape: f32[8,1], index: 3, kind: input, shape index: {}]
  %s4 = inlined_call_operand.vmem [shape: bf16[8,36], index: 4, kind: input, shape index: {}]
  %s5 = inlined_call_operand.vmem [shape: f32[8,1], index: 5, kind: input, shape index: {}]
  %s6 = inlined_call_operand.vmem [shape: f32[8,1], index: 6, kind: input, shape index: {}]
  %s7 = inlined_call_operand.vmem [shape: bf16[4,36], index: 7, kind: input, shape index: {}]
  %s8 = inlined_call_operand.vmem [shape: f32[2,4,256], index: 8, kind: output, shape index: {}]
  %s9 = sld [smem:[#allocation0]]
  $region42: #{resblock_forward.1} parent=0
    _
  %s11 = ssub.s32 1, %s9
  %s12 = scalar_select 0, %s11, %s9
  // Predicated region
  $region2: #{resblock_forward.1} parent=0 // pred_check
    _
  $region3: #{resblock_forward.1} parent=0 // pred_check_branch
    %14 = sbr.rel (0) target = $region5
  $region4: #{resblock_forward.1} parent=0 // pred_region
    _
  $region5: #{resblock_forward.1} parent=0 // pred_fallthru
    _
  // Predicated region
  $region6: #{resblock_forward.1} parent=0 // pred_check
    _
  $region7: #{resblock_forward.1} parent=0 // pred_check_branch
    %16 = sbr.rel (0) target = $region9
  $region8: #{resblock_forward.1} parent=0 // pred_region
    _
  $region9: #{resblock_forward.1} parent=0 // pred_fallthru
    _
  // Predicated region
  $region10: #{resblock_forward.1} parent=0 // pred_check
    _
  $region11: #{resblock_forward.1} parent=0 // pred_check_branch
    %18 = sbr.rel (0) target = $region13
  $region12: #{resblock_forward.1} parent=0 // pred_region
    _
  $region13: #{resblock_forward.1} parent=0 // pred_fallthru
    _
  // Predicated region
  $region14: #{resblock_forward.1} parent=0 // pred_check
    _
  $region15: #{resblock_forward.1} parent=0 // pred_check_branch
    %20 = sbr.rel (0) target = $region17
  $region16: #{resblock_forward.1} parent=0 // pred_region
    _
  $region17: #{resblock_forward.1} parent=0 // pred_fallthru
    _
  // Predicated region
  $region18: #{resblock_forward.1} parent=0 // pred_check
    _
  $region19: #{resblock_forward.1} parent=0 // pred_check_branch
    %22 = sbr.rel (0) target = $region21
  $region20: #{resblock_forward.1} parent=0 // pred_region
    _
  $region21: #{resblock_forward.1} parent=0 // pred_fallthru
    _
  // Predicated region
  $region22: #{resblock_forward.1} parent=0 // pred_check
    _
  $region23: #{resblock_forward.1} parent=0 // pred_check_branch
    %24 = sbr.rel (0) target = $region25
  $region24: #{resblock_forward.1} parent=0 // pred_region
    _
  $region25: #{resblock_forward.1} parent=0 // pred_fallthru
    _
  // Predicated region
  $region26: #{resblock_forward.1} parent=0 // pred_check
    _
  $region27: #{resblock_forward.1} parent=0 // pred_check_branch
    %26 = sbr.rel (0) target = $region29
  $region28: #{resblock_forward.1} parent=0 // pred_region
    _
  $region29: #{resblock_forward.1} parent=0 // pred_fallthru
    _
  // Predicated region
  $region30: #{resblock_forward.1} parent=0 // pred_check
    _
  $region31: #{resblock_forward.1} parent=0 // pred_check_branch
    %28 = sbr.rel (0) target = $region33
  $region32: #{resblock_forward.1} parent=0 // pred_region
    _
  $region33: #{resblock_forward.1} parent=0 // pred_fallthru
    _
  %v30 = vld [vmem:[%s0] sm:$0xff]
  %s31 = scalar_lea.vmem %s0, 8
  %v32 = vld [vmem:[%s31] sm:$0xff]
  %v34 = vcombine.high %v30, %v30
  %v37 = vcombine.high %v32, %v32
  %v39 = vlaneseq
  %v40 = vand.u32 %v39, 127
  %v41 = vadd.s32 %v40, 128
  %v42 = vadd.s32 %v40, 256
  %v43 = vadd.s32 %v40, 384
  %v44 = vand.u32 %v40, 15
  %v45 = vand.u32 %v41, 15
  %v46 = vand.u32 %v42, 15
  %v47 = vand.u32 %v43, 15
  %v48 = vand.u32 %v40, 255
  %v49 = vand.u32 %v41, 255
  %v50 = vand.u32 %v42, 255
  %v51 = vand.u32 %v43, 255
  %v52 = vshra.s32 %v48, 4
  %v53 = vshra.s32 %v49, 4
  %v54 = vshra.s32 %v50, 4
  %v55 = vshra.s32 %v51, 4
  %vm56 = vcmp.ge.s32.totalorder %v44, 1
  %vm57 = vcmp.ge.s32.totalorder %v45, 1
  %vm58 = vcmp.ge.s32.totalorder %v46, 1
  %vm59 = vcmp.ge.s32.totalorder %v47, 1
  %v60 = vsel %vm56, 1, 0
  %v61 = vsel %vm57, 1, 0
  %v62 = vsel %vm58, 1, 0
  %v63 = vsel %vm59, 1, 0
  %v64 = vcvt.s32.f32 %v60
  %v65 = vcvt.s32.f32 %v61
  %v66 = vcvt.s32.f32 %v62
  %v67 = vcvt.s32.f32 %v63
  %vm68 = vcmp.lt.s32.totalorder %v44, 15
  %vm69 = vcmp.lt.s32.totalorder %v45, 15
  %vm70 = vcmp.lt.s32.totalorder %v46, 15
  %vm71 = vcmp.lt.s32.totalorder %v47, 15
  %v72 = vsel %vm68, 1, 0
  %v73 = vsel %vm69, 1, 0
  %v74 = vsel %vm70, 1, 0
  %v75 = vsel %vm71, 1, 0
  %v76 = vcvt.s32.f32 %v72
  %v77 = vcvt.s32.f32 %v73
  %v78 = vcvt.s32.f32 %v74
  %v79 = vcvt.s32.f32 %v75
  %vm80 = vcmp.ge.s32.totalorder %v52, 1
  %vm81 = vcmp.ge.s32.totalorder %v53, 1
  %vm82 = vcmp.ge.s32.totalorder %v54, 1
  %vm83 = vcmp.ge.s32.totalorder %v55, 1
  %v84 = vsel %vm80, 1, 0
  %v85 = vsel %vm81, 1, 0
  %v86 = vsel %vm82, 1, 0
  %v87 = vsel %vm83, 1, 0
  %v88 = vcvt.s32.f32 %v84
  %v89 = vcvt.s32.f32 %v85
  %v90 = vcvt.s32.f32 %v86
  %v91 = vcvt.s32.f32 %v87
  %vm92 = vcmp.lt.s32.totalorder %v52, 15
  %vm93 = vcmp.lt.s32.totalorder %v53, 15
  %vm94 = vcmp.lt.s32.totalorder %v54, 15
  %vm95 = vcmp.lt.s32.totalorder %v55, 15
  %v96 = vsel %vm92, 1, 0
  %v97 = vsel %vm93, 1, 0
  %v98 = vsel %vm94, 1, 0
  %v99 = vsel %vm95, 1, 0
  %v100 = vcvt.s32.f32 %v96
  %v101 = vcvt.s32.f32 %v97
  %v102 = vcvt.s32.f32 %v98
  %v103 = vcvt.s32.f32 %v99
  %v104 = vmul.f32 %v88, %v64
  %v105 = vmul.f32 %v89, %v65
  %v106 = vmul.f32 %v90, %v66
  %v107 = vmul.f32 %v91, %v67
  %v108 = vmul.f32 %v88, %v76
  %v109 = vmul.f32 %v89, %v77
  %v110 = vmul.f32 %v90, %v78
  %v111 = vmul.f32 %v91, %v79
  %v112 = vmul.f32 %v100, %v64
  %v113 = vmul.f32 %v101, %v65
  %v114 = vmul.f32 %v102, %v66
  %v115 = vmul.f32 %v103, %v67
  %v116 = vmul.f32 %v100, %v76
  %v117 = vmul.f32 %v101, %v77
  %v118 = vmul.f32 %v102, %v78
  %v119 = vmul.f32 %v103, %v79
  %120 = vrot.lane.b32.xlu0 %v37, 17
  %v121 = vpop.permute.xlu0 %120
  %123 = vrot.lane.b32.xlu0 %v30, 17
  %v124 = vpop.permute.xlu0 %123
  %125 = vrot.lane.b32.xlu0 %v34, 17
  %v126 = vpop.permute.xlu0 %125
  %127 = vrot.lane.b32.xlu0 %v32, 17
  %v128 = vpop.permute.xlu0 %127
  %vm129 = vcmask 138240
  %v130 = vsel %vm129, %v124, %v126
  %v131 = vsel %vm129, %v126, %v128
  %v132 = vsel %vm129, %v128, %v121
  %v137 = vsel %vm129, %v121, %v124
  %v138 = vmul.f32 %v137, %v104
  %v139 = vmul.f32 %v130, %v105
  %v140 = vmul.f32 %v131, %v106
  %v141 = vmul.f32 %v132, %v107
  %142 = vst [vmem:[#allocation2] sm:$0xf] %v138
  %143 = vst [vmem:[#allocation2 + $0x8] sm:$0xf] %v139
  %144 = vst [vmem:[#allocation2 + $0x10] sm:$0xf] %v140
  %145 = vst [vmem:[#allocation2 + $0x18] sm:$0xf] %v141
  %146 = vrot.lane.b32.xlu0 %v37, 16
  %v147 = vpop.permute.xlu0 %146
  %149 = vrot.lane.b32.xlu0 %v30, 16
  %v150 = vpop.permute.xlu0 %149
  %151 = vrot.lane.b32.xlu0 %v34, 16
  %v152 = vpop.permute.xlu0 %151
  %153 = vrot.lane.b32.xlu0 %v32, 16
  %v154 = vpop.permute.xlu0 %153
  %vm155 = vcmask 130048
  %v156 = vsel %vm155, %v150, %v152
  %v157 = vsel %vm155, %v152, %v154
  %v158 = vsel %vm155, %v154, %v147
  %v163 = vsel %vm155, %v147, %v150
  %v164 = vmul.f32 %v163, %v88
  %v165 = vmul.f32 %v156, %v89
  %v166 = vmul.f32 %v157, %v90
  %v167 = vmul.f32 %v158, %v91
  %v172 = vrot.slane %v164, 4
  %v173 = vrot.slane %v165, 4
  %v174 = vrot.slane %v166, 4
  %v175 = vrot.slane %v167, 4
  %180 = vst [vmem:[#allocation2] sm:$0xf0] %v172
  %181 = vst [vmem:[#allocation2 + $0x8] sm:$0xf0] %v173
  %182 = vst [vmem:[#allocation2 + $0x10] sm:$0xf0] %v174
  %183 = vst [vmem:[#allocation2 + $0x18] sm:$0xf0] %v175
  %184 = vrot.lane.b32.xlu0 %v37, 15
  %v185 = vpop.permute.xlu0 %184
  %187 = vrot.lane.b32.xlu0 %v30, 15
  %v188 = vpop.permute.xlu0 %187
  %189 = vrot.lane.b32.xlu0 %v34, 15
  %v190 = vpop.permute.xlu0 %189
  %191 = vrot.lane.b32.xlu0 %v32, 15
  %v192 = vpop.permute.xlu0 %191
  %vm193 = vcmask 121856
  %v194 = vsel %vm193, %v188, %v190
  %v195 = vsel %vm193, %v190, %v192
  %v196 = vsel %vm193, %v192, %v185
  %v201 = vsel %vm193, %v185, %v188
  %v202 = vmul.f32 %v201, %v108
  %v203 = vmul.f32 %v194, %v109
  %v204 = vmul.f32 %v195, %v110
  %v205 = vmul.f32 %v196, %v111
  %206 = vst [vmem:[#allocation2 + $0x20] sm:$0xf] %v202
  %207 = vst [vmem:[#allocation2 + $0x28] sm:$0xf] %v203
  %208 = vst [vmem:[#allocation2 + $0x30] sm:$0xf] %v204
  %209 = vst [vmem:[#allocation2 + $0x38] sm:$0xf] %v205
  %210 = vrot.lane.b32.xlu0 %v37, 1
  %v211 = vpop.permute.xlu0 %210
  %213 = vrot.lane.b32.xlu0 %v30, 1
  %v214 = vpop.permute.xlu0 %213
  %215 = vrot.lane.b32.xlu0 %v34, 1
  %v216 = vpop.permute.xlu0 %215
  %217 = vrot.lane.b32.xlu0 %v32, 1
  %v218 = vpop.permute.xlu0 %217
  %vm219 = vcmask 7168
  %v220 = vsel %vm219, %v214, %v216
  %v221 = vsel %vm219, %v216, %v218
  %v222 = vsel %vm219, %v218, %v211
  %v227 = vsel %vm219, %v211, %v214
  %v228 = vmul.f32 %v227, %v64
  %v229 = vmul.f32 %v220, %v65
  %v230 = vmul.f32 %v221, %v66
  %v231 = vmul.f32 %v222, %v67
  %v236 = vrot.slane %v228, 4
  %v237 = vrot.slane %v229, 4
  %v238 = vrot.slane %v230, 4
  %v239 = vrot.slane %v231, 4
  %244 = vst [vmem:[#allocation2 + $0x20] sm:$0xf0] %v236
  %245 = vst [vmem:[#allocation2 + $0x28] sm:$0xf0] %v237
  %246 = vst [vmem:[#allocation2 + $0x30] sm:$0xf0] %v238
  %247 = vst [vmem:[#allocation2 + $0x38] sm:$0xf0] %v239
  %248 = vst [vmem:[#allocation2 + $0x40] sm:$0xf] %v30
  %249 = vst [vmem:[#allocation2 + $0x48] sm:$0xf] %v34
  %250 = vst [vmem:[#allocation2 + $0x50] sm:$0xf] %v32
  %251 = vst [vmem:[#allocation2 + $0x58] sm:$0xf] %v37
  %252 = vrot.lane.b32.xlu0 %v30, 127
  %v253 = vpop.permute.xlu0 %252
  %254 = vrot.lane.b32.xlu0 %v34, 127
  %v255 = vpop.permute.xlu0 %254
  %256 = vrot.lane.b32.xlu0 %v32, 127
  %v257 = vpop.permute.xlu0 %256
  %258 = vrot.lane.b32.xlu0 %v37, 127
  %v259 = vpop.permute.xlu0 %258
  %vm260 = vcmask 1039360
  %v261 = vsel %vm260, %v253, %v255
  %v262 = vsel %vm260, %v255, %v257
  %v263 = vsel %vm260, %v257, %v259
  %v269 = vsel %vm260, %v259, %v253
  %v270 = vmul.f32 %v261, %v76
  %v271 = vmul.f32 %v262, %v77
  %v272 = vmul.f32 %v263, %v78
  %v273 = vmul.f32 %v269, %v79
  %v278 = vrot.slane %v270, 4
  %v279 = vrot.slane %v271, 4
  %v280 = vrot.slane %v272, 4
  %v281 = vrot.slane %v273, 4
  %286 = vst [vmem:[#allocation2 + $0x40] sm:$0xf0] %v278
  %287 = vst [vmem:[#allocation2 + $0x48] sm:$0xf0] %v279
  %288 = vst [vmem:[#allocation2 + $0x50] sm:$0xf0] %v280
  %289 = vst [vmem:[#allocation2 + $0x58] sm:$0xf0] %v281
  %290 = vrot.lane.b32.xlu0 %v30, 113
  %v291 = vpop.permute.xlu0 %290
  %292 = vrot.lane.b32.xlu0 %v34, 113
  %v293 = vpop.permute.xlu0 %292
  %294 = vrot.lane.b32.xlu0 %v32, 113
  %v295 = vpop.permute.xlu0 %294
  %296 = vrot.lane.b32.xlu0 %v37, 113
  %v297 = vpop.permute.xlu0 %296
  %vm298 = vcmask 924672
  %v299 = vsel %vm298, %v291, %v293
  %v300 = vsel %vm298, %v293, %v295
  %v301 = vsel %vm298, %v295, %v297
  %v307 = vsel %vm298, %v297, %v291
  %v308 = vmul.f32 %v299, %v112
  %v309 = vmul.f32 %v300, %v113
  %v310 = vmul.f32 %v301, %v114
  %v311 = vmul.f32 %v307, %v115
  %312 = vst [vmem:[#allocation2 + $0x60] sm:$0xf] %v308
  %313 = vst [vmem:[#allocation2 + $0x68] sm:$0xf] %v309
  %314 = vst [vmem:[#allocation2 + $0x70] sm:$0xf] %v310
  %315 = vst [vmem:[#allocation2 + $0x78] sm:$0xf] %v311
  %316 = vrot.lane.b32.xlu0 %v30, 112
  %v317 = vpop.permute.xlu0 %316
  %318 = vrot.lane.b32.xlu0 %v34, 112
  %v319 = vpop.permute.xlu0 %318
  %320 = vrot.lane.b32.xlu0 %v32, 112
  %v321 = vpop.permute.xlu0 %320
  %322 = vrot.lane.b32.xlu0 %v37, 112
  %v323 = vpop.permute.xlu0 %322
  %vm324 = vcmask 916480
  %v325 = vsel %vm324, %v317, %v319
  %v326 = vsel %vm324, %v319, %v321
  %v327 = vsel %vm324, %v321, %v323
  %v333 = vsel %vm324, %v323, %v317
  %v334 = vmul.f32 %v325, %v100
  %v335 = vmul.f32 %v326, %v101
  %v336 = vmul.f32 %v327, %v102
  %v337 = vmul.f32 %v333, %v103
  %v342 = vrot.slane %v334, 4
  %v343 = vrot.slane %v335, 4
  %v344 = vrot.slane %v336, 4
  %v345 = vrot.slane %v337, 4
  %350 = vst [vmem:[#allocation2 + $0x60] sm:$0xf0] %v342
  %351 = vst [vmem:[#allocation2 + $0x68] sm:$0xf0] %v343
  %352 = vst [vmem:[#allocation2 + $0x70] sm:$0xf0] %v344
  %353 = vst [vmem:[#allocation2 + $0x78] sm:$0xf0] %v345
  %354 = vrot.lane.b32.xlu0 %v30, 111
  %v355 = vpop.permute.xlu0 %354
  %356 = vrot.lane.b32.xlu0 %v34, 111
  %v357 = vpop.permute.xlu0 %356
  %358 = vrot.lane.b32.xlu0 %v32, 111
  %v359 = vpop.permute.xlu0 %358
  %360 = vrot.lane.b32.xlu0 %v37, 111
  %v361 = vpop.permute.xlu0 %360
  %vm362 = vcmask 908288
  %v363 = vsel %vm362, %v355, %v357
  %v364 = vsel %vm362, %v357, %v359
  %v365 = vsel %vm362, %v359, %v361
  %v371 = vsel %vm362, %v361, %v355
  %v372 = vmul.f32 %v363, %v116
  %v373 = vmul.f32 %v364, %v117
  %v374 = vmul.f32 %v365, %v118
  %v375 = vmul.f32 %v371, %v119
  %376 = vst [vmem:[#allocation2 + $0x80] sm:$0xf] %v372
  %377 = vst [vmem:[#allocation2 + $0x88] sm:$0xf] %v373
  %378 = vst [vmem:[#allocation2 + $0x90] sm:$0xf] %v374
  %379 = vst [vmem:[#allocation2 + $0x98] sm:$0xf] %v375
  %v380 = vld [vmem:[#allocation2] sm:$0xff]
  %v381 = vld [vmem:[#allocation2 + $0x8] sm:$0xff]
  %v382 = vld [vmem:[#allocation2 + $0x10] sm:$0xff]
  %v383 = vld [vmem:[#allocation2 + $0x18] sm:$0xff]
  %v384 = vld [vmem:[#allocation2 + $0x20] sm:$0xff]
  %v385 = vld [vmem:[#allocation2 + $0x28] sm:$0xff]
  %v386 = vld [vmem:[#allocation2 + $0x30] sm:$0xff]
  %v387 = vld [vmem:[#allocation2 + $0x38] sm:$0xff]
  %v388 = vld [vmem:[#allocation2 + $0x40] sm:$0xff]
  %v389 = vld [vmem:[#allocation2 + $0x48] sm:$0xff]
  %v390 = vld [vmem:[#allocation2 + $0x50] sm:$0xff]
  %v391 = vld [vmem:[#allocation2 + $0x58] sm:$0xff]
  %v392 = vld [vmem:[#allocation2 + $0x60] sm:$0xff]
  %v393 = vld [vmem:[#allocation2 + $0x68] sm:$0xff]
  %v394 = vld [vmem:[#allocation2 + $0x70] sm:$0xff]
  %v395 = vld [vmem:[#allocation2 + $0x78] sm:$0xff]
  %v396 = vld [vmem:[#allocation2 + $0x80] sm:$0xf]
  %v397 = vld [vmem:[#allocation2 + $0x88] sm:$0xf]
  %v398 = vld [vmem:[#allocation2 + $0x90] sm:$0xf]
  %v399 = vld [vmem:[#allocation2 + $0x98] sm:$0xf]
  %v400 = vpack.c.bf16 %v384, %v380
  %v401 = vpack.c.bf16 %v385, %v381
  %v402 = vpack.c.bf16 %v386, %v382
  %v403 = vpack.c.bf16 %v387, %v383
  %v404 = vpack.c.bf16 %v392, %v388
  %v405 = vpack.c.bf16 %v393, %v389
  %v406 = vpack.c.bf16 %v394, %v390
  %v407 = vpack.c.bf16 %v395, %v391
  %v408 = vpack.c.bf16 %v396, %v396
  %v409 = vpack.c.bf16 %v397, %v397
  %v410 = vpack.c.bf16 %v398, %v398
  %v411 = vpack.c.bf16 %v399, %v399
  %v412 = vld [vmem:[%s1] sm:$0xf]
  %vm413 = vcmask 293888
  %v415 = vsel %vm413, %v412, 0
  %vm417 = vcmask 1041408
  %v419 = vsel %vm417, %v408, 0
  %v422 = vsel %vm417, %v409, 0
  %v425 = vsel %vm417, %v410, 0
  %v428 = vsel %vm417, %v411, 0
  %430 = vmatprep.subr.bf16.mxu0 %v401
  %431 = vmatpush1.bf16.msra.mxu0 %v400
  %432 = vmatprep.subr.bf16.mxu0 %v405
  %433 = vmatpush1.bf16.msra.mxu0 %v404
  %434 = vmatprep.subr.bf16.mxu0 %v422
  %435 = vmatpush1.bf16.msra.mxu0 %v419
  %436 = vmatprep.subr.bf16.mxu0 0
  %437 = vmatpush1.bf16.msra.mxu0 0
  %438 = vmatprep.subr.bf16.mxu0 0
  %439 = vmatpush1.bf16.msra.mxu0 0
  %440 = vmatprep.subr.bf16.mxu0 0
  %441 = vmatpush1.bf16.msra.mxu0 0
  %442 = vmatprep.subr.bf16.mxu0 0
  %443 = vmatpush1.bf16.msra.mxu0 0
  %444 = vmatprep.subr.bf16.mxu0 0
  %445 = vmatpush1.bf16.msra.mxu0 0
  %446 = vmatprep.subr.bf16.mxu0 0
  %447 = vmatpush1.bf16.msra.mxu0 0
  %448 = vmatprep.subr.bf16.mxu0 0
  %449 = vmatpush1.bf16.msra.mxu0 0
  %450 = vmatprep.subr.bf16.mxu0 0
  %451 = vmatpush1.bf16.msra.mxu0 0
  %452 = vmatprep.subr.bf16.mxu0 0
  %453 = vmatpush1.bf16.msra.mxu0 0
  %454 = vmatprep.subr.bf16.mxu0 0
  %455 = vmatpush1.bf16.msra.mxu0 0
  %456 = vmatprep.subr.bf16.mxu0 0
  %457 = vmatpush1.bf16.msra.mxu0 0
  %458 = vmatprep.subr.bf16.mxu0 0
  %459 = vmatpush1.bf16.msra.mxu0 0
  %460 = vmatprep.subr.bf16.mxu0 0
  %461 = vmatpush1.bf16.msra.mxu0 0
  %462 = vmatprep.mubr.bf16.mxu0 0
  %463 = vmatmul.mubr.bf16.gmra.mrb[0].mxu0 %v415
  %v464 = vpop.f32.mrb[0].mxu0
  %v465 = vadd.f32 0.0, %v464
  %v466 = vpop.f32.mrb[0].mxu0
  %v467 = vadd.f32 0.0, %v466
  %v468 = vpop.f32.mrb[0].mxu0
  %v469 = vpop.f32.mrb[0].mxu0
  %470 = vdwg.mxu0
  %471 = vmatprep.subr.bf16.mxu0 %v403
  %472 = vmatpush1.bf16.msra.mxu0 %v402
  %473 = vmatprep.subr.bf16.mxu0 %v407
  %474 = vmatpush1.bf16.msra.mxu0 %v406
  %475 = vmatprep.subr.bf16.mxu0 %v428
  %476 = vmatpush1.bf16.msra.mxu0 %v425
  %477 = vmatprep.subr.bf16.mxu0 0
  %478 = vmatpush1.bf16.msra.mxu0 0
  %479 = vmatprep.subr.bf16.mxu0 0
  %480 = vmatpush1.bf16.msra.mxu0 0
  %481 = vmatprep.subr.bf16.mxu0 0
  %482 = vmatpush1.bf16.msra.mxu0 0
  %483 = vmatprep.subr.bf16.mxu0 0
  %484 = vmatpush1.bf16.msra.mxu0 0
  %485 = vmatprep.subr.bf16.mxu0 0
  %486 = vmatpush1.bf16.msra.mxu0 0
  %487 = vmatprep.subr.bf16.mxu0 0
  %488 = vmatpush1.bf16.msra.mxu0 0
  %489 = vmatprep.subr.bf16.mxu0 0
  %490 = vmatpush1.bf16.msra.mxu0 0
  %491 = vmatprep.subr.bf16.mxu0 0
  %492 = vmatpush1.bf16.msra.mxu0 0
  %493 = vmatprep.subr.bf16.mxu0 0
  %494 = vmatpush1.bf16.msra.mxu0 0
  %495 = vmatprep.subr.bf16.mxu0 0
  %496 = vmatpush1.bf16.msra.mxu0 0
  %497 = vmatprep.subr.bf16.mxu0 0
  %498 = vmatpush1.bf16.msra.mxu0 0
  %499 = vmatprep.subr.bf16.mxu0 0
  %500 = vmatpush1.bf16.msra.mxu0 0
  %501 = vmatprep.subr.bf16.mxu0 0
  %502 = vmatpush1.bf16.msra.mxu0 0
  %503 = vmatprep.mubr.bf16.mxu0 0
  %504 = vmatmul.mubr.bf16.gmra.mrb[0].mxu0 %v415
  %v505 = vpop.f32.mrb[0].mxu0
  %v506 = vadd.f32 0.0, %v505
  %v507 = vpop.f32.mrb[0].mxu0
  %v508 = vadd.f32 0.0, %v507
  %v509 = vpop.f32.mrb[0].mxu0
  %v510 = vpop.f32.mrb[0].mxu0
  %511 = vdwg.mxu0
  %v512 = vadd.f32 %v465, %v467
  %v513 = vadd.f32 %v512, %v506
  %v514 = vadd.f32 %v513, %v508
  %515 = vadd.xlane.f32.xlu0 %v514
  %v516 = vpop.xlane.xlu0 %515
  %v517 = vrcp.pop 512.0
  %v518 = vmul.f32 %v516, %v517
  %v519 = vsub.f32 %v465, %v518
  %v520 = vsub.f32 %v467, %v518
  %v521 = vsub.f32 %v506, %v518
  %v522 = vsub.f32 %v508, %v518
  %v523 = vmul.f32 %v519, %v519
  %v524 = vmul.f32 %v520, %v520
  %v525 = vmul.f32 %v521, %v521
  %v526 = vmul.f32 %v522, %v522
  %v527 = vadd.f32 %v523, %v524
  %v528 = vadd.f32 %v527, %v525
  %v529 = vadd.f32 %v528, %v526
  %530 = vadd.xlane.f32.xlu0 %v529
  %v531 = vpop.xlane.xlu0 %530
  %v532 = vmul.f32 %v531, %v517
  %v533 = vadd.f32 %v532, 1e-05
  %v534 = vrsqrt.pop %v533
  %v535 = vmul.f32 %v519, %v534
  %v536 = vmul.f32 %v520, %v534
  %v537 = vmul.f32 %v521, %v534
  %v538 = vmul.f32 %v522, %v534
  %v539 = vld [vmem:[%s2] sm:$0xff]
  %541 = vset.pattern.permute.xlu0 0
  %542 = vperm.xlu0 %541, %v539
  %v543 = vpop.permute.xlu0 %542
  %v545 = vmul.f32 %v535, %v543
  %v546 = vmul.f32 %v536, %v543
  %v547 = vmul.f32 %v537, %v543
  %v548 = vmul.f32 %v538, %v543
  %v549 = vld [vmem:[%s3] sm:$0xff]
  %551 = vset.pattern.permute.xlu0 0
  %552 = vperm.xlu0 %551, %v549
  %v553 = vpop.permute.xlu0 %552
  %v555 = vadd.f32 %v545, %v553
  %v556 = vadd.f32 %v546, %v553
  %v557 = vadd.f32 %v547, %v553
  %v558 = vadd.f32 %v548, %v553
  %v559 = vxor.u32 %v555, 2147483648
  %v560 = vxor.u32 %v556, 2147483648
  %v561 = vxor.u32 %v557, 2147483648
  %v562 = vxor.u32 %v558, 2147483648
  %v563 = vmul.f32 %v559, 1.442695
  %v564 = vpow.pop %v563
  %v565 = vmul.f32 %v560, 1.442695
  %v566 = vpow.pop %v565
  %v567 = vmul.f32 %v561, 1.442695
  %v568 = vpow.pop %v567
  %v569 = vmul.f32 %v562, 1.442695
  %v570 = vpow.pop %v569
  %v571 = vadd.f32 %v564, 1.0
  %v572 = vadd.f32 %v566, 1.0
  %v573 = vadd.f32 %v568, 1.0
  %v574 = vadd.f32 %v570, 1.0
  %v575 = vrcp.pop %v571
  %v576 = vmul.f32 1.0, %v575
  %v577 = vrcp.pop %v572
  %v578 = vmul.f32 1.0, %v577
  %v579 = vrcp.pop %v573
  %v580 = vmul.f32 1.0, %v579
  %v581 = vrcp.pop %v574
  %v582 = vmul.f32 1.0, %v581
  %v587 = vrot.slane %v576, 4
  %v588 = vrot.slane %v578, 4
  %v589 = vrot.slane %v580, 4
  %v590 = vrot.slane %v582, 4
  %v595 = vmul.f32 %v555, %v587
  %v596 = vmul.f32 %v556, %v588
  %v597 = vmul.f32 %v557, %v589
  %v598 = vmul.f32 %v558, %v590
  %600 = vrot.lane.b32.xlu0 %v598, 17
  %v601 = vpop.permute.xlu0 %600
  %606 = vrot.lane.b32.xlu0 %v595, 17
  %v607 = vpop.permute.xlu0 %606
  %608 = vrot.lane.b32.xlu0 %v596, 17
  %v609 = vpop.permute.xlu0 %608
  %610 = vrot.lane.b32.xlu0 %v597, 17
  %v611 = vpop.permute.xlu0 %610
  %v612 = vsel %vm129, %v607, %v609
  %v613 = vsel %vm129, %v609, %v611
  %v614 = vsel %vm129, %v611, %v601
  %v619 = vsel %vm129, %v601, %v607
  %v620 = vmul.f32 %v619, %v104
  %v621 = vmul.f32 %v612, %v105
  %v622 = vmul.f32 %v613, %v106
  %v623 = vmul.f32 %v614, %v107
  %624 = vst [vmem:[#allocation2] sm:$0xf] %v620
  %625 = vst [vmem:[#allocation2 + $0x8] sm:$0xf] %v621
  %626 = vst [vmem:[#allocation2 + $0x10] sm:$0xf] %v622
  %627 = vst [vmem:[#allocation2 + $0x18] sm:$0xf] %v623
  %628 = vrot.lane.b32.xlu0 %v598, 16
  %v629 = vpop.permute.xlu0 %628
  %631 = vrot.lane.b32.xlu0 %v595, 16
  %v632 = vpop.permute.xlu0 %631
  %633 = vrot.lane.b32.xlu0 %v596, 16
  %v634 = vpop.permute.xlu0 %633
  %635 = vrot.lane.b32.xlu0 %v597, 16
  %v636 = vpop.permute.xlu0 %635
  %v637 = vsel %vm155, %v632, %v634
  %v638 = vsel %vm155, %v634, %v636
  %v639 = vsel %vm155, %v636, %v629
  %v644 = vsel %vm155, %v629, %v632
  %v645 = vmul.f32 %v644, %v88
  %v646 = vmul.f32 %v637, %v89
  %v647 = vmul.f32 %v638, %v90
  %v648 = vmul.f32 %v639, %v91
  %v653 = vrot.slane %v645, 4
  %v654 = vrot.slane %v646, 4
  %v655 = vrot.slane %v647, 4
  %v656 = vrot.slane %v648, 4
  %661 = vst [vmem:[#allocation2] sm:$0xf0] %v653
  %662 = vst [vmem:[#allocation2 + $0x8] sm:$0xf0] %v654
  %663 = vst [vmem:[#allocation2 + $0x10] sm:$0xf0] %v655
  %664 = vst [vmem:[#allocation2 + $0x18] sm:$0xf0] %v656
  %665 = vrot.lane.b32.xlu0 %v598, 15
  %v666 = vpop.permute.xlu0 %665
  %668 = vrot.lane.b32.xlu0 %v595, 15
  %v669 = vpop.permute.xlu0 %668
  %670 = vrot.lane.b32.xlu0 %v596, 15
  %v671 = vpop.permute.xlu0 %670
  %672 = vrot.lane.b32.xlu0 %v597, 15
  %v673 = vpop.permute.xlu0 %672
  %v674 = vsel %vm193, %v669, %v671
  %v675 = vsel %vm193, %v671, %v673
  %v676 = vsel %vm193, %v673, %v666
  %v681 = vsel %vm193, %v666, %v669
  %v682 = vmul.f32 %v681, %v108
  %v683 = vmul.f32 %v674, %v109
  %v684 = vmul.f32 %v675, %v110
  %v685 = vmul.f32 %v676, %v111
  %686 = vst [vmem:[#allocation2 + $0x20] sm:$0xf] %v682
  %687 = vst [vmem:[#allocation2 + $0x28] sm:$0xf] %v683
  %688 = vst [vmem:[#allocation2 + $0x30] sm:$0xf] %v684
  %689 = vst [vmem:[#allocation2 + $0x38] sm:$0xf] %v685
  %690 = vrot.lane.b32.xlu0 %v598, 1
  %v691 = vpop.permute.xlu0 %690
  %693 = vrot.lane.b32.xlu0 %v595, 1
  %v694 = vpop.permute.xlu0 %693
  %695 = vrot.lane.b32.xlu0 %v596, 1
  %v696 = vpop.permute.xlu0 %695
  %697 = vrot.lane.b32.xlu0 %v597, 1
  %v698 = vpop.permute.xlu0 %697
  %v699 = vsel %vm219, %v694, %v696
  %v700 = vsel %vm219, %v696, %v698
  %v701 = vsel %vm219, %v698, %v691
  %v706 = vsel %vm219, %v691, %v694
  %v707 = vmul.f32 %v706, %v64
  %v708 = vmul.f32 %v699, %v65
  %v709 = vmul.f32 %v700, %v66
  %v710 = vmul.f32 %v701, %v67
  %v715 = vrot.slane %v707, 4
  %v716 = vrot.slane %v708, 4
  %v717 = vrot.slane %v709, 4
  %v718 = vrot.slane %v710, 4
  %723 = vst [vmem:[#allocation2 + $0x20] sm:$0xf0] %v715
  %724 = vst [vmem:[#allocation2 + $0x28] sm:$0xf0] %v716
  %725 = vst [vmem:[#allocation2 + $0x30] sm:$0xf0] %v717
  %726 = vst [vmem:[#allocation2 + $0x38] sm:$0xf0] %v718
  %727 = vst [vmem:[#allocation2 + $0x40] sm:$0xf] %v595
  %728 = vst [vmem:[#allocation2 + $0x48] sm:$0xf] %v596
  %729 = vst [vmem:[#allocation2 + $0x50] sm:$0xf] %v597
  %730 = vst [vmem:[#allocation2 + $0x58] sm:$0xf] %v598
  %731 = vrot.lane.b32.xlu0 %v595, 127
  %v732 = vpop.permute.xlu0 %731
  %733 = vrot.lane.b32.xlu0 %v596, 127
  %v734 = vpop.permute.xlu0 %733
  %735 = vrot.lane.b32.xlu0 %v597, 127
  %v736 = vpop.permute.xlu0 %735
  %737 = vrot.lane.b32.xlu0 %v598, 127
  %v738 = vpop.permute.xlu0 %737
  %v739 = vsel %vm260, %v732, %v734
  %v740 = vsel %vm260, %v734, %v736
  %v741 = vsel %vm260, %v736, %v738
  %v747 = vsel %vm260, %v738, %v732
  %v748 = vmul.f32 %v739, %v76
  %v749 = vmul.f32 %v740, %v77
  %v750 = vmul.f32 %v741, %v78
  %v751 = vmul.f32 %v747, %v79
  %v756 = vrot.slane %v748, 4
  %v757 = vrot.slane %v749, 4
  %v758 = vrot.slane %v750, 4
  %v759 = vrot.slane %v751, 4
  %764 = vst [vmem:[#allocation2 + $0x40] sm:$0xf0] %v756
  %765 = vst [vmem:[#allocation2 + $0x48] sm:$0xf0] %v757
  %766 = vst [vmem:[#allocation2 + $0x50] sm:$0xf0] %v758
  %767 = vst [vmem:[#allocation2 + $0x58] sm:$0xf0] %v759
  %768 = vrot.lane.b32.xlu0 %v595, 113
  %v769 = vpop.permute.xlu0 %768
  %770 = vrot.lane.b32.xlu0 %v596, 113
  %v771 = vpop.permute.xlu0 %770
  %772 = vrot.lane.b32.xlu0 %v597, 113
  %v773 = vpop.permute.xlu0 %772
  %774 = vrot.lane.b32.xlu0 %v598, 113
  %v775 = vpop.permute.xlu0 %774
  %v776 = vsel %vm298, %v769, %v771
  %v777 = vsel %vm298, %v771, %v773
  %v778 = vsel %vm298, %v773, %v775
  %v784 = vsel %vm298, %v775, %v769
  %v785 = vmul.f32 %v776, %v112
  %v786 = vmul.f32 %v777, %v113
  %v787 = vmul.f32 %v778, %v114
  %v788 = vmul.f32 %v784, %v115
  %789 = vst [vmem:[#allocation2 + $0x60] sm:$0xf] %v785
  %790 = vst [vmem:[#allocation2 + $0x68] sm:$0xf] %v786
  %791 = vst [vmem:[#allocation2 + $0x70] sm:$0xf] %v787
  %792 = vst [vmem:[#allocation2 + $0x78] sm:$0xf] %v788
  %793 = vrot.lane.b32.xlu0 %v595, 112
  %v794 = vpop.permute.xlu0 %793
  %795 = vrot.lane.b32.xlu0 %v596, 112
  %v796 = vpop.permute.xlu0 %795
  %797 = vrot.lane.b32.xlu0 %v597, 112
  %v798 = vpop.permute.xlu0 %797
  %799 = vrot.lane.b32.xlu0 %v598, 112
  %v800 = vpop.permute.xlu0 %799
  %v801 = vsel %vm324, %v794, %v796
  %v802 = vsel %vm324, %v796, %v798
  %v803 = vsel %vm324, %v798, %v800
  %v809 = vsel %vm324, %v800, %v794
  %v810 = vmul.f32 %v801, %v100
  %v811 = vmul.f32 %v802, %v101
  %v812 = vmul.f32 %v803, %v102
  %v813 = vmul.f32 %v809, %v103
  %v818 = vrot.slane %v810, 4
  %v819 = vrot.slane %v811, 4
  %v820 = vrot.slane %v812, 4
  %v821 = vrot.slane %v813, 4
  %826 = vst [vmem:[#allocation2 + $0x60] sm:$0xf0] %v818
  %827 = vst [vmem:[#allocation2 + $0x68] sm:$0xf0] %v819
  %828 = vst [vmem:[#allocation2 + $0x70] sm:$0xf0] %v820
  %829 = vst [vmem:[#allocation2 + $0x78] sm:$0xf0] %v821
  %830 = vrot.lane.b32.xlu0 %v595, 111
  %v831 = vpop.permute.xlu0 %830
  %832 = vrot.lane.b32.xlu0 %v596, 111
  %v833 = vpop.permute.xlu0 %832
  %834 = vrot.lane.b32.xlu0 %v597, 111
  %v835 = vpop.permute.xlu0 %834
  %836 = vrot.lane.b32.xlu0 %v598, 111
  %v837 = vpop.permute.xlu0 %836
  %v838 = vsel %vm362, %v831, %v833
  %v839 = vsel %vm362, %v833, %v835
  %v840 = vsel %vm362, %v835, %v837
  %v846 = vsel %vm362, %v837, %v831
  %v847 = vmul.f32 %v838, %v116
  %v848 = vmul.f32 %v839, %v117
  %v849 = vmul.f32 %v840, %v118
  %v850 = vmul.f32 %v846, %v119
  %851 = vst [vmem:[#allocation2 + $0x80] sm:$0xf] %v847
  %852 = vst [vmem:[#allocation2 + $0x88] sm:$0xf] %v848
  %853 = vst [vmem:[#allocation2 + $0x90] sm:$0xf] %v849
  %854 = vst [vmem:[#allocation2 + $0x98] sm:$0xf] %v850
  %v855 = vld [vmem:[#allocation2] sm:$0xff]
  %v856 = vld [vmem:[#allocation2 + $0x8] sm:$0xff]
  %v857 = vld [vmem:[#allocation2 + $0x10] sm:$0xff]
  %v858 = vld [vmem:[#allocation2 + $0x18] sm:$0xff]
  %v859 = vld [vmem:[#allocation2 + $0x20] sm:$0xff]
  %v860 = vld [vmem:[#allocation2 + $0x28] sm:$0xff]
  %v861 = vld [vmem:[#allocation2 + $0x30] sm:$0xff]
  %v862 = vld [vmem:[#allocation2 + $0x38] sm:$0xff]
  %v863 = vld [vmem:[#allocation2 + $0x40] sm:$0xff]
  %v864 = vld [vmem:[#allocation2 + $0x48] sm:$0xff]
  %v865 = vld [vmem:[#allocation2 + $0x50] sm:$0xff]
  %v866 = vld [vmem:[#allocation2 + $0x58] sm:$0xff]
  %v867 = vld [vmem:[#allocation2 + $0x60] sm:$0xff]
  %v868 = vld [vmem:[#allocation2 + $0x68] sm:$0xff]
  %v869 = vld [vmem:[#allocation2 + $0x70] sm:$0xff]
  %v870 = vld [vmem:[#allocation2 + $0x78] sm:$0xff]
  %v871 = vld [vmem:[#allocation2 + $0x80] sm:$0xf]
  %v872 = vld [vmem:[#allocation2 + $0x88] sm:$0xf]
  %v873 = vld [vmem:[#allocation2 + $0x90] sm:$0xf]
  %v874 = vld [vmem:[#allocation2 + $0x98] sm:$0xf]
  %v875 = vpack.c.bf16 %v859, %v855
  %v876 = vpack.c.bf16 %v860, %v856
  %v877 = vpack.c.bf16 %v861, %v857
  %v878 = vpack.c.bf16 %v862, %v858
  %v879 = vpack.c.bf16 %v867, %v863
  %v880 = vpack.c.bf16 %v868, %v864
  %v881 = vpack.c.bf16 %v869, %v865
  %v882 = vpack.c.bf16 %v870, %v866
  %v883 = vpack.c.bf16 %v871, %v871
  %v884 = vpack.c.bf16 %v872, %v872
  %v885 = vpack.c.bf16 %v873, %v873
  %v886 = vpack.c.bf16 %v874, %v874
  %v887 = vld [vmem:[%s4] sm:$0xf]
  %v889 = vsel %vm413, %v887, 0
  %v892 = vsel %vm417, %v883, 0
  %v895 = vsel %vm417, %v884, 0
  %v898 = vsel %vm417, %v885, 0
  %v901 = vsel %vm417, %v886, 0
  %903 = vmatprep.subr.bf16.mxu0 %v876
  %904 = vmatpush1.bf16.msra.mxu0 %v875
  %905 = vmatprep.subr.bf16.mxu0 %v880
  %906 = vmatpush1.bf16.msra.mxu0 %v879
  %907 = vmatprep.subr.bf16.mxu0 %v895
  %908 = vmatpush1.bf16.msra.mxu0 %v892
  %909 = vmatprep.subr.bf16.mxu0 0
  %910 = vmatpush1.bf16.msra.mxu0 0
  %911 = vmatprep.subr.bf16.mxu0 0
  %912 = vmatpush1.bf16.msra.mxu0 0
  %913 = vmatprep.subr.bf16.mxu0 0
  %914 = vmatpush1.bf16.msra.mxu0 0
  %915 = vmatprep.subr.bf16.mxu0 0
  %916 = vmatpush1.bf16.msra.mxu0 0
  %917 = vmatprep.subr.bf16.mxu0 0
  %918 = vmatpush1.bf16.msra.mxu0 0
  %919 = vmatprep.subr.bf16.mxu0 0
  %920 = vmatpush1.bf16.msra.mxu0 0
  %921 = vmatprep.subr.bf16.mxu0 0
  %922 = vmatpush1.bf16.msra.mxu0 0
  %923 = vmatprep.subr.bf16.mxu0 0
  %924 = vmatpush1.bf16.msra.mxu0 0
  %925 = vmatprep.subr.bf16.mxu0 0
  %926 = vmatpush1.bf16.msra.mxu0 0
  %927 = vmatprep.subr.bf16.mxu0 0
  %928 = vmatpush1.bf16.msra.mxu0 0
  %929 = vmatprep.subr.bf16.mxu0 0
  %930 = vmatpush1.bf16.msra.mxu0 0
  %931 = vmatprep.subr.bf16.mxu0 0
  %932 = vmatpush1.bf16.msra.mxu0 0
  %933 = vmatprep.subr.bf16.mxu0 0
  %934 = vmatpush1.bf16.msra.mxu0 0
  %935 = vmatprep.mubr.bf16.mxu0 0
  %936 = vmatmul.mubr.bf16.gmra.mrb[0].mxu0 %v889
  %v937 = vpop.f32.mrb[0].mxu0
  %v938 = vadd.f32 0.0, %v937
  %v939 = vpop.f32.mrb[0].mxu0
  %v940 = vadd.f32 0.0, %v939
  %v941 = vpop.f32.mrb[0].mxu0
  %v942 = vpop.f32.mrb[0].mxu0
  %943 = vdwg.mxu0
  %944 = vmatprep.subr.bf16.mxu0 %v878
  %945 = vmatpush1.bf16.msra.mxu0 %v877
  %946 = vmatprep.subr.bf16.mxu0 %v882
  %947 = vmatpush1.bf16.msra.mxu0 %v881
  %948 = vmatprep.subr.bf16.mxu0 %v901
  %949 = vmatpush1.bf16.msra.mxu0 %v898
  %950 = vmatprep.subr.bf16.mxu0 0
  %951 = vmatpush1.bf16.msra.mxu0 0
  %952 = vmatprep.subr.bf16.mxu0 0
  %953 = vmatpush1.bf16.msra.mxu0 0
  %954 = vmatprep.subr.bf16.mxu0 0
  %955 = vmatpush1.bf16.msra.mxu0 0
  %956 = vmatprep.subr.bf16.mxu0 0
  %957 = vmatpush1.bf16.msra.mxu0 0
  %958 = vmatprep.subr.bf16.mxu0 0
  %959 = vmatpush1.bf16.msra.mxu0 0
  %960 = vmatprep.subr.bf16.mxu0 0
  %961 = vmatpush1.bf16.msra.mxu0 0
  %962 = vmatprep.subr.bf16.mxu0 0
  %963 = vmatpush1.bf16.msra.mxu0 0
  %964 = vmatprep.subr.bf16.mxu0 0
  %965 = vmatpush1.bf16.msra.mxu0 0
  %966 = vmatprep.subr.bf16.mxu0 0
  %967 = vmatpush1.bf16.msra.mxu0 0
  %968 = vmatprep.subr.bf16.mxu0 0
  %969 = vmatpush1.bf16.msra.mxu0 0
  %970 = vmatprep.subr.bf16.mxu0 0
  %971 = vmatpush1.bf16.msra.mxu0 0
  %972 = vmatprep.subr.bf16.mxu0 0
  %973 = vmatpush1.bf16.msra.mxu0 0
  %974 = vmatprep.subr.bf16.mxu0 0
  %975 = vmatpush1.bf16.msra.mxu0 0
  %976 = vmatprep.mubr.bf16.mxu0 0
  %977 = vmatmul.mubr.bf16.gmra.mrb[0].mxu0 %v889
  %v978 = vpop.f32.mrb[0].mxu0
  %v979 = vadd.f32 0.0, %v978
  %v980 = vpop.f32.mrb[0].mxu0
  %v981 = vadd.f32 0.0, %v980
  %v982 = vpop.f32.mrb[0].mxu0
  %v983 = vpop.f32.mrb[0].mxu0
  %984 = vdwg.mxu0
  %v985 = vadd.f32 %v938, %v940
  %v986 = vadd.f32 %v985, %v979
  %v987 = vadd.f32 %v986, %v981
  %988 = vadd.xlane.f32.xlu0 %v987
  %v989 = vpop.xlane.xlu0 %988
  %v990 = vmul.f32 %v989, %v517
  %v991 = vsub.f32 %v938, %v990
  %v992 = vsub.f32 %v940, %v990
  %v993 = vsub.f32 %v979, %v990
  %v994 = vsub.f32 %v981, %v990
  %v995 = vmul.f32 %v991, %v991
  %v996 = vmul.f32 %v992, %v992
  %v997 = vmul.f32 %v993, %v993
  %v998 = vmul.f32 %v994, %v994
  %v999 = vadd.f32 %v995, %v996
  %v1000 = vadd.f32 %v999, %v997
  %v1001 = vadd.f32 %v1000, %v998
  %1002 = vadd.xlane.f32.xlu0 %v1001
  %v1003 = vpop.xlane.xlu0 %1002
  %v1004 = vmul.f32 %v1003, %v517
  %v1005 = vadd.f32 %v1004, 1e-05
  %v1006 = vrsqrt.pop %v1005
  %v1007 = vmul.f32 %v991, %v1006
  %v1008 = vmul.f32 %v992, %v1006
  %v1009 = vmul.f32 %v993, %v1006
  %v1010 = vmul.f32 %v994, %v1006
  %v1011 = vld [vmem:[%s5] sm:$0xff]
  %1013 = vset.pattern.permute.xlu0 0
  %1014 = vperm.xlu0 %1013, %v1011
  %v1015 = vpop.permute.xlu0 %1014
  %v1017 = vmul.f32 %v1007, %v1015
  %v1018 = vmul.f32 %v1008, %v1015
  %v1019 = vmul.f32 %v1009, %v1015
  %v1020 = vmul.f32 %v1010, %v1015
  %v1021 = vld [vmem:[%s6] sm:$0xff]
  %1023 = vset.pattern.permute.xlu0 0
  %1024 = vperm.xlu0 %1023, %v1021
  %v1025 = vpop.permute.xlu0 %1024
  %v1027 = vadd.f32 %v1017, %v1025
  %v1028 = vadd.f32 %v1018, %v1025
  %v1029 = vadd.f32 %v1019, %v1025
  %v1030 = vadd.f32 %v1020, %v1025
  %v1031 = vxor.u32 %v1027, 2147483648
  %v1032 = vxor.u32 %v1028, 2147483648
  %v1033 = vxor.u32 %v1029, 2147483648
  %v1034 = vxor.u32 %v1030, 2147483648
  %v1035 = vmul.f32 %v1031, 1.442695
  %v1036 = vpow.pop %v1035
  %v1037 = vmul.f32 %v1032, 1.442695
  %v1038 = vpow.pop %v1037
  %v1039 = vmul.f32 %v1033, 1.442695
  %v1040 = vpow.pop %v1039
  %v1041 = vmul.f32 %v1034, 1.442695
  %v1042 = vpow.pop %v1041
  %v1043 = vadd.f32 %v1036, 1.0
  %v1044 = vadd.f32 %v1038, 1.0
  %v1045 = vadd.f32 %v1040, 1.0
  %v1046 = vadd.f32 %v1042, 1.0
  %v1047 = vrcp.pop %v1043
  %v1048 = vmul.f32 1.0, %v1047
  %v1049 = vrcp.pop %v1044
  %v1050 = vmul.f32 1.0, %v1049
  %v1051 = vrcp.pop %v1045
  %v1052 = vmul.f32 1.0, %v1051
  %v1053 = vrcp.pop %v1046
  %v1054 = vmul.f32 1.0, %v1053
  %v1059 = vrot.slane %v1048, 4
  %v1060 = vrot.slane %v1050, 4
  %v1061 = vrot.slane %v1052, 4
  %v1062 = vrot.slane %v1054, 4
  %v1067 = vmul.f32 %v1027, %v1059
  %v1068 = vmul.f32 %v1028, %v1060
  %v1069 = vmul.f32 %v1029, %v1061
  %v1070 = vmul.f32 %v1030, %v1062
  %1072 = vrot.lane.b32.xlu0 %v1070, 17
  %v1073 = vpop.permute.xlu0 %1072
  %1078 = vrot.lane.b32.xlu0 %v1067, 17
  %v1079 = vpop.permute.xlu0 %1078
  %1080 = vrot.lane.b32.xlu0 %v1068, 17
  %v1081 = vpop.permute.xlu0 %1080
  %1082 = vrot.lane.b32.xlu0 %v1069, 17
  %v1083 = vpop.permute.xlu0 %1082
  %v1084 = vsel %vm129, %v1079, %v1081
  %v1085 = vsel %vm129, %v1081, %v1083
  %v1086 = vsel %vm129, %v1083, %v1073
  %v1091 = vsel %vm129, %v1073, %v1079
  %v1092 = vmul.f32 %v1091, %v104
  %v1093 = vmul.f32 %v1084, %v105
  %v1094 = vmul.f32 %v1085, %v106
  %v1095 = vmul.f32 %v1086, %v107
  %1096 = vst [vmem:[#allocation2] sm:$0xf] %v1092
  %1097 = vst [vmem:[#allocation2 + $0x8] sm:$0xf] %v1093
  %1098 = vst [vmem:[#allocation2 + $0x10] sm:$0xf] %v1094
  %1099 = vst [vmem:[#allocation2 + $0x18] sm:$0xf] %v1095
  %1100 = vrot.lane.b32.xlu0 %v1070, 16
  %v1101 = vpop.permute.xlu0 %1100
  %1103 = vrot.lane.b32.xlu0 %v1067, 16
  %v1104 = vpop.permute.xlu0 %1103
  %1105 = vrot.lane.b32.xlu0 %v1068, 16
  %v1106 = vpop.permute.xlu0 %1105
  %1107 = vrot.lane.b32.xlu0 %v1069, 16
  %v1108 = vpop.permute.xlu0 %1107
  %v1109 = vsel %vm155, %v1104, %v1106
  %v1110 = vsel %vm155, %v1106, %v1108
  %v1111 = vsel %vm155, %v1108, %v1101
  %v1116 = vsel %vm155, %v1101, %v1104
  %v1117 = vmul.f32 %v1116, %v88
  %v1118 = vmul.f32 %v1109, %v89
  %v1119 = vmul.f32 %v1110, %v90
  %v1120 = vmul.f32 %v1111, %v91
  %v1125 = vrot.slane %v1117, 4
  %v1126 = vrot.slane %v1118, 4
  %v1127 = vrot.slane %v1119, 4
  %v1128 = vrot.slane %v1120, 4
  %1133 = vst [vmem:[#allocation2] sm:$0xf0] %v1125
  %1134 = vst [vmem:[#allocation2 + $0x8] sm:$0xf0] %v1126
  %1135 = vst [vmem:[#allocation2 + $0x10] sm:$0xf0] %v1127
  %1136 = vst [vmem:[#allocation2 + $0x18] sm:$0xf0] %v1128
  %1137 = vrot.lane.b32.xlu0 %v1070, 15
  %v1138 = vpop.permute.xlu0 %1137
  %1140 = vrot.lane.b32.xlu0 %v1067, 15
  %v1141 = vpop.permute.xlu0 %1140
  %1142 = vrot.lane.b32.xlu0 %v1068, 15
  %v1143 = vpop.permute.xlu0 %1142
  %1144 = vrot.lane.b32.xlu0 %v1069, 15
  %v1145 = vpop.permute.xlu0 %1144
  %v1146 = vsel %vm193, %v1141, %v1143
  %v1147 = vsel %vm193, %v1143, %v1145
  %v1148 = vsel %vm193, %v1145, %v1138
  %v1153 = vsel %vm193, %v1138, %v1141
  %v1154 = vmul.f32 %v1153, %v108
  %v1155 = vmul.f32 %v1146, %v109
  %v1156 = vmul.f32 %v1147, %v110
  %v1157 = vmul.f32 %v1148, %v111
  %1158 = vst [vmem:[#allocation2 + $0x20] sm:$0xf] %v1154
  %1159 = vst [vmem:[#allocation2 + $0x28] sm:$0xf] %v1155
  %1160 = vst [vmem:[#allocation2 + $0x30] sm:$0xf] %v1156
  %1161 = vst [vmem:[#allocation2 + $0x38] sm:$0xf] %v1157
  %1162 = vrot.lane.b32.xlu0 %v1070, 1
  %v1163 = vpop.permute.xlu0 %1162
  %1165 = vrot.lane.b32.xlu0 %v1067, 1
  %v1166 = vpop.permute.xlu0 %1165
  %1167 = vrot.lane.b32.xlu0 %v1068, 1
  %v1168 = vpop.permute.xlu0 %1167
  %1169 = vrot.lane.b32.xlu0 %v1069, 1
  %v1170 = vpop.permute.xlu0 %1169
  %v1171 = vsel %vm219, %v1166, %v1168
  %v1172 = vsel %vm219, %v1168, %v1170
  %v1173 = vsel %vm219, %v1170, %v1163
  %v1178 = vsel %vm219, %v1163, %v1166
  %v1179 = vmul.f32 %v1178, %v64
  %v1180 = vmul.f32 %v1171, %v65
  %v1181 = vmul.f32 %v1172, %v66
  %v1182 = vmul.f32 %v1173, %v67
  %v1187 = vrot.slane %v1179, 4
  %v1188 = vrot.slane %v1180, 4
  %v1189 = vrot.slane %v1181, 4
  %v1190 = vrot.slane %v1182, 4
  %1195 = vst [vmem:[#allocation2 + $0x20] sm:$0xf0] %v1187
  %1196 = vst [vmem:[#allocation2 + $0x28] sm:$0xf0] %v1188
  %1197 = vst [vmem:[#allocation2 + $0x30] sm:$0xf0] %v1189
  %1198 = vst [vmem:[#allocation2 + $0x38] sm:$0xf0] %v1190
  %1199 = vst [vmem:[#allocation2 + $0x40] sm:$0xf] %v1067
  %1200 = vst [vmem:[#allocation2 + $0x48] sm:$0xf] %v1068
  %1201 = vst [vmem:[#allocation2 + $0x50] sm:$0xf] %v1069
  %1202 = vst [vmem:[#allocation2 + $0x58] sm:$0xf] %v1070
  %1203 = vrot.lane.b32.xlu0 %v1067, 127
  %v1204 = vpop.permute.xlu0 %1203
  %1205 = vrot.lane.b32.xlu0 %v1068, 127
  %v1206 = vpop.permute.xlu0 %1205
  %1207 = vrot.lane.b32.xlu0 %v1069, 127
  %v1208 = vpop.permute.xlu0 %1207
  %1209 = vrot.lane.b32.xlu0 %v1070, 127
  %v1210 = vpop.permute.xlu0 %1209
  %v1211 = vsel %vm260, %v1204, %v1206
  %v1212 = vsel %vm260, %v1206, %v1208
  %v1213 = vsel %vm260, %v1208, %v1210
  %v1219 = vsel %vm260, %v1210, %v1204
  %v1220 = vmul.f32 %v1211, %v76
  %v1221 = vmul.f32 %v1212, %v77
  %v1222 = vmul.f32 %v1213, %v78
  %v1223 = vmul.f32 %v1219, %v79
  %v1228 = vrot.slane %v1220, 4
  %v1229 = vrot.slane %v1221, 4
  %v1230 = vrot.slane %v1222, 4
  %v1231 = vrot.slane %v1223, 4
  %1236 = vst [vmem:[#allocation2 + $0x40] sm:$0xf0] %v1228
  %1237 = vst [vmem:[#allocation2 + $0x48] sm:$0xf0] %v1229
  %1238 = vst [vmem:[#allocation2 + $0x50] sm:$0xf0] %v1230
  %1239 = vst [vmem:[#allocation2 + $0x58] sm:$0xf0] %v1231
  %1240 = vrot.lane.b32.xlu0 %v1067, 113
  %v1241 = vpop.permute.xlu0 %1240
  %1242 = vrot.lane.b32.xlu0 %v1068, 113
  %v1243 = vpop.permute.xlu0 %1242
  %1244 = vrot.lane.b32.xlu0 %v1069, 113
  %v1245 = vpop.permute.xlu0 %1244
  %1246 = vrot.lane.b32.xlu0 %v1070, 113
  %v1247 = vpop.permute.xlu0 %1246
  %v1248 = vsel %vm298, %v1241, %v1243
  %v1249 = vsel %vm298, %v1243, %v1245
  %v1250 = vsel %vm298, %v1245, %v1247
  %v1256 = vsel %vm298, %v1247, %v1241
  %v1257 = vmul.f32 %v1248, %v112
  %v1258 = vmul.f32 %v1249, %v113
  %v1259 = vmul.f32 %v1250, %v114
  %v1260 = vmul.f32 %v1256, %v115
  %1261 = vst [vmem:[#allocation2 + $0x60] sm:$0xf] %v1257
  %1262 = vst [vmem:[#allocation2 + $0x68] sm:$0xf] %v1258
  %1263 = vst [vmem:[#allocation2 + $0x70] sm:$0xf] %v1259
  %1264 = vst [vmem:[#allocation2 + $0x78] sm:$0xf] %v1260
  %1265 = vrot.lane.b32.xlu0 %v1067, 112
  %v1266 = vpop.permute.xlu0 %1265
  %1267 = vrot.lane.b32.xlu0 %v1068, 112
  %v1268 = vpop.permute.xlu0 %1267
  %1269 = vrot.lane.b32.xlu0 %v1069, 112
  %v1270 = vpop.permute.xlu0 %1269
  %1271 = vrot.lane.b32.xlu0 %v1070, 112
  %v1272 = vpop.permute.xlu0 %1271
  %v1273 = vsel %vm324, %v1266, %v1268
  %v1274 = vsel %vm324, %v1268, %v1270
  %v1275 = vsel %vm324, %v1270, %v1272
  %v1281 = vsel %vm324, %v1272, %v1266
  %v1282 = vmul.f32 %v1273, %v100
  %v1283 = vmul.f32 %v1274, %v101
  %v1284 = vmul.f32 %v1275, %v102
  %v1285 = vmul.f32 %v1281, %v103
  %v1290 = vrot.slane %v1282, 4
  %v1291 = vrot.slane %v1283, 4
  %v1292 = vrot.slane %v1284, 4
  %v1293 = vrot.slane %v1285, 4
  %1298 = vst [vmem:[#allocation2 + $0x60] sm:$0xf0] %v1290
  %1299 = vst [vmem:[#allocation2 + $0x68] sm:$0xf0] %v1291
  %1300 = vst [vmem:[#allocation2 + $0x70] sm:$0xf0] %v1292
  %1301 = vst [vmem:[#allocation2 + $0x78] sm:$0xf0] %v1293
  %1302 = vrot.lane.b32.xlu0 %v1067, 111
  %v1303 = vpop.permute.xlu0 %1302
  %1304 = vrot.lane.b32.xlu0 %v1068, 111
  %v1305 = vpop.permute.xlu0 %1304
  %1306 = vrot.lane.b32.xlu0 %v1069, 111
  %v1307 = vpop.permute.xlu0 %1306
  %1308 = vrot.lane.b32.xlu0 %v1070, 111
  %v1309 = vpop.permute.xlu0 %1308
  %v1310 = vsel %vm362, %v1303, %v1305
  %v1311 = vsel %vm362, %v1305, %v1307
  %v1312 = vsel %vm362, %v1307, %v1309
  %v1318 = vsel %vm362, %v1309, %v1303
  %v1319 = vmul.f32 %v1310, %v116
  %v1320 = vmul.f32 %v1311, %v117
  %v1321 = vmul.f32 %v1312, %v118
  %v1322 = vmul.f32 %v1318, %v119
  %1323 = vst [vmem:[#allocation2 + $0x80] sm:$0xf] %v1319
  %1324 = vst [vmem:[#allocation2 + $0x88] sm:$0xf] %v1320
  %1325 = vst [vmem:[#allocation2 + $0x90] sm:$0xf] %v1321
  %1326 = vst [vmem:[#allocation2 + $0x98] sm:$0xf] %v1322
  %v1327 = vld [vmem:[#allocation2] sm:$0xff]
  %v1328 = vld [vmem:[#allocation2 + $0x8] sm:$0xff]
  %v1329 = vld [vmem:[#allocation2 + $0x10] sm:$0xff]
  %v1330 = vld [vmem:[#allocation2 + $0x18] sm:$0xff]
  %v1331 = vld [vmem:[#allocation2 + $0x20] sm:$0xff]
  %v1332 = vld [vmem:[#allocation2 + $0x28] sm:$0xff]
  %v1333 = vld [vmem:[#allocation2 + $0x30] sm:$0xff]
  %v1334 = vld [vmem:[#allocation2 + $0x38] sm:$0xff]
  %v1335 = vld [vmem:[#allocation2 + $0x40] sm:$0xff]
  %v1336 = vld [vmem:[#allocation2 + $0x48] sm:$0xff]
  %v1337 = vld [vmem:[#allocation2 + $0x50] sm:$0xff]
  %v1338 = vld [vmem:[#allocation2 + $0x58] sm:$0xff]
  %v1339 = vld [vmem:[#allocation2 + $0x60] sm:$0xff]
  %v1340 = vld [vmem:[#allocation2 + $0x68] sm:$0xff]
  %v1341 = vld [vmem:[#allocation2 + $0x70] sm:$0xff]
  %v1342 = vld [vmem:[#allocation2 + $0x78] sm:$0xff]
  %v1343 = vld [vmem:[#allocation2 + $0x80] sm:$0xf]
  %v1344 = vld [vmem:[#allocation2 + $0x88] sm:$0xf]
  %v1345 = vld [vmem:[#allocation2 + $0x90] sm:$0xf]
  %v1346 = vld [vmem:[#allocation2 + $0x98] sm:$0xf]
  %v1347 = vpack.c.bf16 %v1331, %v1327
  %v1348 = vpack.c.bf16 %v1332, %v1328
  %v1349 = vpack.c.bf16 %v1333, %v1329
  %v1350 = vpack.c.bf16 %v1334, %v1330
  %v1351 = vpack.c.bf16 %v1339, %v1335
  %v1352 = vpack.c.bf16 %v1340, %v1336
  %v1353 = vpack.c.bf16 %v1341, %v1337
  %v1354 = vpack.c.bf16 %v1342, %v1338
  %v1355 = vpack.c.bf16 %v1343, %v1343
  %v1356 = vpack.c.bf16 %v1344, %v1344
  %v1357 = vpack.c.bf16 %v1345, %v1345
  %v1358 = vpack.c.bf16 %v1346, %v1346
  %v1359 = vld [vmem:[%s7] sm:$0x3]
  %v1361 = vsel %vm413, %v1359, 0
  %v1364 = vsel %vm417, %v1355, 0
  %v1367 = vsel %vm417, %v1356, 0
  %v1370 = vsel %vm417, %v1357, 0
  %v1373 = vsel %vm417, %v1358, 0
  %1375 = vmatprep.subr.bf16.mxu0 %v1348
  %1376 = vmatpush1.bf16.msra.mxu0 %v1347
  %1377 = vmatprep.subr.bf16.mxu0 %v1352
  %1378 = vmatpush1.bf16.msra.mxu0 %v1351
  %1379 = vmatprep.subr.bf16.mxu0 %v1367
  %1380 = vmatpush1.bf16.msra.mxu0 %v1364
  %1381 = vmatprep.subr.bf16.mxu0 0
  %1382 = vmatpush1.bf16.msra.mxu0 0
  %1383 = vmatprep.subr.bf16.mxu0 0
  %1384 = vmatpush1.bf16.msra.mxu0 0
  %1385 = vmatprep.subr.bf16.mxu0 0
  %1386 = vmatpush1.bf16.msra.mxu0 0
  %1387 = vmatprep.subr.bf16.mxu0 0
  %1388 = vmatpush1.bf16.msra.mxu0 0
  %1389 = vmatprep.subr.bf16.mxu0 0
  %1390 = vmatpush1.bf16.msra.mxu0 0
  %1391 = vmatprep.subr.bf16.mxu0 0
  %1392 = vmatpush1.bf16.msra.mxu0 0
  %1393 = vmatprep.subr.bf16.mxu0 0
  %1394 = vmatpush1.bf16.msra.mxu0 0
  %1395 = vmatprep.subr.bf16.mxu0 0
  %1396 = vmatpush1.bf16.msra.mxu0 0
  %1397 = vmatprep.subr.bf16.mxu0 0
  %1398 = vmatpush1.bf16.msra.mxu0 0
  %1399 = vmatprep.subr.bf16.mxu0 0
  %1400 = vmatpush1.bf16.msra.mxu0 0
  %1401 = vmatprep.subr.bf16.mxu0 0
  %1402 = vmatpush1.bf16.msra.mxu0 0
  %1403 = vmatprep.subr.bf16.mxu0 0
  %1404 = vmatpush1.bf16.msra.mxu0 0
  %1405 = vmatprep.subr.bf16.mxu0 0
  %1406 = vmatpush1.bf16.msra.mxu0 0
  %1407 = vmatprep.mubr.bf16.mxu0 0
  %1408 = vmatmul.mubr.bf16.gmra.mrb[0].mxu0 %v1361
  %v1409 = vpop.f32.mrb[0].mxu0
  %v1410 = vadd.f32 %v30, %v1409
  %v1411 = vpop.f32.mrb[0].mxu0
  %v1412 = vadd.f32 %v34, %v1411
  %v1413 = vpop.f32.mrb[0].mxu0
  %v1414 = vpop.f32.mrb[0].mxu0
  %1415 = vdwg.mxu0
  %1416 = vmatprep.subr.bf16.mxu0 %v1350
  %1417 = vmatpush1.bf16.msra.mxu0 %v1349
  %1418 = vmatprep.subr.bf16.mxu0 %v1354
  %1419 = vmatpush1.bf16.msra.mxu0 %v1353
  %1420 = vmatprep.subr.bf16.mxu0 %v1373
  %1421 = vmatpush1.bf16.msra.mxu0 %v1370
  %1422 = vmatprep.subr.bf16.mxu0 0
  %1423 = vmatpush1.bf16.msra.mxu0 0
  %1424 = vmatprep.subr.bf16.mxu0 0
  %1425 = vmatpush1.bf16.msra.mxu0 0
  %1426 = vmatprep.subr.bf16.mxu0 0
  %1427 = vmatpush1.bf16.msra.mxu0 0
  %1428 = vmatprep.subr.bf16.mxu0 0
  %1429 = vmatpush1.bf16.msra.mxu0 0
  %1430 = vmatprep.subr.bf16.mxu0 0
  %1431 = vmatpush1.bf16.msra.mxu0 0
  %1432 = vmatprep.subr.bf16.mxu0 0
  %1433 = vmatpush1.bf16.msra.mxu0 0
  %1434 = vmatprep.subr.bf16.mxu0 0
  %1435 = vmatpush1.bf16.msra.mxu0 0
  %1436 = vmatprep.subr.bf16.mxu0 0
  %1437 = vmatpush1.bf16.msra.mxu0 0
  %1438 = vmatprep.subr.bf16.mxu0 0
  %1439 = vmatpush1.bf16.msra.mxu0 0
  %1440 = vmatprep.subr.bf16.mxu0 0
  %1441 = vmatpush1.bf16.msra.mxu0 0
  %1442 = vmatprep.subr.bf16.mxu0 0
  %1443 = vmatpush1.bf16.msra.mxu0 0
  %1444 = vmatprep.subr.bf16.mxu0 0
  %1445 = vmatpush1.bf16.msra.mxu0 0
  %1446 = vmatprep.subr.bf16.mxu0 0
  %1447 = vmatpush1.bf16.msra.mxu0 0
  %1448 = vmatprep.mubr.bf16.mxu0 0
  %1449 = vmatmul.mubr.bf16.gmra.mrb[0].mxu0 %v1361
  %v1450 = vpop.f32.mrb[0].mxu0
  %v1451 = vadd.f32 %v32, %v1450
  %v1452 = vpop.f32.mrb[0].mxu0
  %v1453 = vadd.f32 %v37, %v1452
  %v1454 = vpop.f32.mrb[0].mxu0
  %v1455 = vpop.f32.mrb[0].mxu0
  %1456 = vdwg.mxu0
  %v1459 = vcombine.low %v1410, %v1412
  %1461 = vst [vmem:[%s8] sm:$0xff] %v1459
  %v1464 = vcombine.low %v1451, %v1453
  %s1466 = scalar_lea.vmem %s8, 8
  %1467 = vst [vmem:[%s1466] sm:$0xff] %v1464
  // Predicated region
  $region34: #{resblock_forward.1} parent=0 // pred_check
    _
  $region35: #{resblock_forward.1} parent=0 // pred_check_branch
    %1469 = sbr.rel (0) target = $region37
  $region36: #{resblock_forward.1} parent=0 // pred_region
    _
  $region37: #{resblock_forward.1} parent=0 // pred_fallthru
    _
  // Predicated region
  $region38: #{resblock_forward.1} parent=0 // pred_check
    _
  $region39: #{resblock_forward.1} parent=0 // pred_check_branch
    %1471 = sbr.rel (0) target = $region41
  $region40: #{resblock_forward.1} parent=0 // pred_region
    _
  $region41: #{resblock_forward.1} parent=0 // pred_fallthru
    _

</llo_original>
